<compile_context>
chip_gen: v7x
topology: tpu7x:2x2x1
jax: 0.10.0
libtpu: 0.0.40
codegen_flags: <defaults>
</compile_context>

<pallas_src>
import functools

import jax
import jax.numpy as jnp
from jax.experimental import pallas as pl
from jax.experimental.pallas import tpu as pltpu

_EPS = 1e-5

# Rows of the packed per-channel parameter array (13, C):
#   rows 0..8  : depthwise 3x3 weight taps, row index = kh*3 + kw
#   rows 9,10  : BN1 gamma, beta
#   rows 11,12 : BN2 gamma, beta
_G1, _B1, _G2, _B2 = 9, 10, 11, 12

_STAT_CHUNK = 64   # rows per partial-sum chunk for BN1 stats (bounds live vregs)


def _fused_kernel(x_ref, w1_ref, p_ref, o_ref, ybuf, ebuf, obuf, *, H, W):
    """Whole forward pass for one image, everything resident in VMEM.

    x_ref : (Cin, H*W)       f32   input, channel-major (free reshape of NCHW)
    w1_ref: (Cin, C)         bf16  1x1 conv weight (pre-transposed, pre-cast)
    p_ref : (13, C)          f32   packed depthwise taps + BN gammas/betas
    o_ref : (C, Ho*Wo)       f32   output, channel-major (free reshape to NCHW)
    ybuf  : (H, W, C)        f32   scratch: BN1+ReLU result, channels-last
    ebuf  : (H+1, Wo, C)     f32   scratch: even-W columns, zero top-pad row
    obuf  : (H+1, Wo+1, C)   f32   scratch: odd-W columns, zero top row + left col
    """
    Cin, HW = x_ref.shape
    C = w1_ref.shape[1]
    Ho, Wo = H // 2, W // 2

    # Identity for the final MXU transpose (iota-built, not on the data path).
    rows = jax.lax.broadcasted_iota(jnp.int32, (C, C), 0)
    cols = jax.lax.broadcasted_iota(jnp.int32, (C, C), 1)
    eye_c = (rows == cols).astype(jnp.float32)

    # ---- 1x1 conv on the MXU: trans-A dot_general, bf16 in / f32 accumulate.
    #      x is cast to bf16 while still lane-dense (Cin, HW); no explicit
    #      transpose is materialized -- the MXU consumes the transposed LHS.
    y = jax.lax.dot_general(
        x_ref[...].astype(jnp.bfloat16), w1_ref[...],
        (((0,), (0,)), ((), ())),
        preferred_element_type=jnp.float32)                      # (HW, C) f32

    # ---- BN1 (training-mode batch stats), single pass, chunked reductions so
    #      y (32 vregs) is the only large value held live across the stats.
    s1 = jnp.zeros((1, C), jnp.float32)
    q1 = jnp.zeros((1, C), jnp.float32)
    r = 0
    while r < HW:
        sz = min(_STAT_CHUNK, HW - r)
        yc = jax.lax.slice_in_dim(y, r, r + sz, axis=0)
        s1 = s1 + jnp.sum(yc, axis=0, keepdims=True)
        q1 = q1 + jnp.sum(yc * yc, axis=0, keepdims=True)
        r += sz
    inv_n1 = 1.0 / HW
    m1 = s1 * inv_n1
    v1 = jnp.maximum(q1 * inv_n1 - m1 * m1, 0.0)                 # clamp: no NaN
    sc1 = p_ref[pl.ds(_G1, 1), :] * jax.lax.rsqrt(v1 + _EPS)
    sh1 = p_ref[pl.ds(_B1, 1), :] - m1 * sc1
    y = jnp.maximum(y * sc1 + sh1, 0.0)

    # One aligned store of the BN1+ReLU result.  (Kept on purpose: deinterleaving
    # straight from the value would need strided value slices / double-strided
    # ref reads; only sublane- or major-strided ref accesses are used below.)
    ybuf[...] = y.reshape(H, W, C)

    # ---- Deinterleave the W axis once (stride-2 sublane gather paid 2x, not 9x).
    #      ebuf: even columns (kw=1 taps), zero top-pad row.
    #      obuf: odd columns (kw=0/2 taps), zero top-pad row + zero left-pad col,
    #      so every tap below is a start-aligned slab read.
    ebuf[pl.ds(0, 1), :, :] = jnp.zeros((1, Wo, C), jnp.float32)
    ebuf[pl.ds(1, H), :, :] = ybuf[:, pl.ds(0, Wo, stride=2), :]
    obuf[pl.ds(0, 1), :, :] = jnp.zeros((1, Wo + 1, C), jnp.float32)
    obuf[:, pl.ds(0, 1), :] = jnp.zeros((H + 1, 1, C), jnp.float32)
    obuf[pl.ds(1, H), pl.ds(1, Wo), :] = ybuf[:, pl.ds(1, Wo, stride=2), :]

    # ---- Depthwise 3x3, stride 2: per kh only TWO slab loads (stride-2 on the
    #      cheap major axis only); kw=0 / kw=2 are unit-stride value slices of
    #      the odd slab, kw=1 is the even slab.
    acc = jnp.zeros((Ho, Wo, C), jnp.float32)
    for kh in range(3):
        eb = ebuf[pl.ds(kh, Ho, stride=2), :, :]                 # (Ho, Wo,   C)
        ob = obuf[pl.ds(kh, Ho, stride=2), :, :]                 # (Ho, Wo+1, C)
        acc = acc + ob[:, :Wo, :] * p_ref[kh * 3 + 0, :]         # kw = 0
        acc = acc + eb * p_ref[kh * 3 + 1, :]                    # kw = 1
        acc = acc + ob[:, 1:, :] * p_ref[kh * 3 + 2, :]          # kw = 2

    # ---- BN2 (single pass, tiny: 8 vregs) folded to scale/shift + ReLU.
    a = acc.reshape(Ho * Wo, C)
    inv_n2 = 1.0 / (Ho * Wo)
    s2 = jnp.sum(a, axis=0, keepdims=True)
    q2 = jnp.sum(a * a, axis=0, keepdims=True)
    m2 = s2 * inv_n2
    v2 = jnp.maximum(q2 * inv_n2 - m2 * m2, 0.0)
    sc2 = p_ref[pl.ds(_G2, 1), :] * jax.lax.rsqrt(v2 + _EPS)
    sh2 = p_ref[pl.ds(_B2, 1), :] - m2 * sc2
    a = jnp.maximum(a * sc2 + sh2, 0.0)                          # (Ho*Wo, C)

    # ---- (Ho*Wo, C) -> (C, Ho*Wo) transpose on the otherwise-idle MXU (NT-form
    #      identity matmul).  HIGHEST precision keeps the stored activations at
    #      f32 accuracy and is free since the MXU has nothing else to do here.
    o_ref[...] = jax.lax.dot_general(
        eye_c, a, (((1,), (1,)), ((), ())),
        precision=jax.lax.Precision.HIGHEST,
        preferred_element_type=jnp.float32)                      # (C, Ho*Wo)


def prepare_params(w1_oihw, g1, b1, w2_oihw, g2, b2):
    """One-time weight preprocessing, kept out of the per-call jit path."""
    C = w1_oihw.shape[0]
    # (C, Cin, 1, 1) -> (Cin, C), pre-cast to bf16 for the MXU.
    w1_mat = jnp.asarray(w1_oihw[:, :, 0, 0]).T.astype(jnp.bfloat16)
    # (C, 1, 3, 3) -> (9, C) with row index = kh*3 + kw.
    w2_mat = jnp.transpose(w2_oihw[:, 0, :, :], (1, 2, 0)).reshape(9, C)
    packed = jnp.concatenate(
        [w2_mat,
         g1.reshape(1, C), b1.reshape(1, C),
         g2.reshape(1, C), b2.reshape(1, C)],
        axis=0).astype(jnp.float32)                              # (13, C)
    return w1_mat, packed


@jax.jit
def forward_prepared(x_nchw, w1_mat, packed):
    """x_nchw: (1, Cin, H, W) f32; weights preprocessed by prepare_params()."""
    N, Cin, H, W = x_nchw.shape
    assert N == 1, "reference module runs with batch size 1"
    assert H % 2 == 0 and W % 2 == 0
    C = w1_mat.shape[1]
    Ho, Wo = H // 2, W // 2

    x2 = x_nchw.reshape(Cin, H * W)            # NCHW with N=1 -> bitcast, no copy

    # Note: at larger H/W or batch > 1, add a grid axis (tiled over H or N) marked
    # "parallel" so the second TensorCore on v7x is used and the output store is
    # lane-dense; at (1, 16, 16, 16) the split overhead exceeds the win, so a
    # single grid-less VMEM-resident block is used.
    out_cm = pl.pallas_call(
        functools.partial(_fused_kernel, H=H, W=W),
        out_shape=jax.ShapeDtypeStruct((C, Ho * Wo), jnp.float32),
        in_specs=[
            pl.BlockSpec(memory_space=pltpu.MemorySpace.VMEM),
            pl.BlockSpec(memory_space=pltpu.MemorySpace.VMEM),
            pl.BlockSpec(memory_space=pltpu.MemorySpace.VMEM),
        ],
        out_specs=pl.BlockSpec(memory_space=pltpu.MemorySpace.VMEM),
        scratch_shapes=[
            pltpu.VMEM((H, W, C), jnp.float32),
            pltpu.VMEM((H + 1, Wo, C), jnp.float32),
            pltpu.VMEM((H + 1, Wo + 1, C), jnp.float32),
        ],
    )(x2, w1_mat, packed)

    return out_cm.reshape(1, C, Ho, Wo)        # bitcast, no copy


def forward(x_nchw, w1_oihw, g1, b1, w2_oihw, g2, b2):
    """PyTorch-compatible entry point. x_nchw: (1, 16, H, W) float32."""
    w1_mat, packed = prepare_params(w1_oihw, g1, b1, w2_oihw, g2, b2)
    return forward_prepared(x_nchw, w1_mat, packed)


def reference(x_nchw, w1_oihw, g1, b1, w2_oihw, g2, b2):
    """Pure-JAX (XLA) reference mirroring the PyTorch module in training mode.

    The 1x1 conv uses the same bf16-operand / f32-accumulate contraction as the
    kernel; BN and the depthwise 3x3 taps are exact f32 math.
    """
    def bn_relu(y, g, b):
        m = y.mean(axis=(0, 2, 3), keepdims=True)
        v = ((y - m) ** 2).mean(axis=(0, 2, 3), keepdims=True)   # biased variance
        y = (y - m) / jnp.sqrt(v + _EPS) * g.reshape(1, -1, 1, 1) \
            + b.reshape(1, -1, 1, 1)
        return jnp.maximum(y, 0.0)

    y = jnp.einsum('nihw,oi->nohw',
                   x_nchw.astype(jnp.bfloat16),
                   w1_oihw[:, :, 0, 0].astype(jnp.bfloat16),
                   preferred_element_type=jnp.float32)
    y = bn_relu(y, g1, b1)

    N, C, H, W = y.shape
    Ho, Wo = H // 2, W // 2
    yp = jnp.pad(y, ((0, 0), (0, 0), (1, 1), (1, 1)))
    acc = jnp.zeros((N, C, Ho, Wo), jnp.float32)
    for kh in range(3):
        for kw in range(3):
            tap = w2_oihw[:, 0, kh, kw].reshape(1, C, 1, 1)
            acc = acc + yp[:, :, kh:kh + 2 * Ho:2, kw:kw + 2 * Wo:2] * tap
    return bn_relu(acc, g2, b2)


if __name__ == "__main__":
    key = jax.random.PRNGKey(0)
    ks = jax.random.split(key, 7)

    # Small shapes consistent with the module (Cin=16 and C=48 are fixed by it).
    N, Cin, H, W, C = 1, 16, 16, 16, 48

    x = jax.random.normal(ks[0], (N, Cin, H, W), jnp.float32)
    w1 = jax.random.normal(ks[1], (C, Cin, 1, 1), jnp.float32) * 0.2
    g1 = jax.random.uniform(ks[2], (C,), jnp.float32, 0.5, 1.5)
    b1 = jax.random.normal(ks[3], (C,), jnp.float32) * 0.1
    w2 = jax.random.normal(ks[4], (C, 1, 3, 3), jnp.float32) * 0.2
    g2 = jax.random.uniform(ks[5], (C,), jnp.float32, 0.5, 1.5)
    b2 = jax.random.normal(ks[6], (C,), jnp.float32) * 0.1

    out = forward(x, w1, g1, b1, w2, g2, b2)
    out = jax.block_until_ready(out)

    ref = reference(x, w1, g1, b1, w2, g2, b2)
    assert out.shape == ref.shape, (out.shape, ref.shape)
    err = jnp.max(jnp.abs(out - ref))
    assert jnp.allclose(out, ref, atol=5e-3, rtol=5e-3), f"max abs err {err}"

    print("KERNEL_OK")
</pallas_src>

<mosaic_0001>
module attributes {stable_mosaic.version = 11 : i64} {
  func.func @_fused_kernel(%arg0: memref<16x256xf32, #tpu.memory_space<vmem>>, %arg1: memref<16x48xbf16, #tpu.memory_space<vmem>>, %arg2: memref<13x48xf32, #tpu.memory_space<vmem>>, %arg3: memref<48x64xf32, #tpu.memory_space<vmem>>, %arg4: memref<16x16x48xf32, #tpu.memory_space<vmem>>, %arg5: memref<17x8x48xf32, #tpu.memory_space<vmem>>, %arg6: memref<17x9x48xf32, #tpu.memory_space<vmem>>) attributes {dimension_semantics = [], scalar_prefetch = 0 : i64, scratch_operands = 3 : i64, tpu.core_type = #tpu.core_type<tc>} {
    %0 = tpu.iota {dimensions = array<i32: 0>} : vector<48x48xi32>
    %1 = tpu.iota {dimensions = array<i32: 1>} : vector<48x48xi32>
    %2 = arith.cmpi eq, %0, %1 : vector<48x48xi32>
    %3 = arith.extui %2 : vector<48x48xi1> to vector<48x48xi32>
    %4 = arith.sitofp %3 : vector<48x48xi32> to vector<48x48xf32>
    %c0 = arith.constant 0 : index
    %c0_0 = arith.constant 0 : index
    %5 = vector.load %arg0[%c0, %c0_0] : memref<16x256xf32, #tpu.memory_space<vmem>>, vector<16x256xf32>
    %6 = arith.truncf %5 : vector<16x256xf32> to vector<16x256xbf16>
    %c0_1 = arith.constant 0 : index
    %c0_2 = arith.constant 0 : index
    %7 = vector.load %arg1[%c0_1, %c0_2] : memref<16x48xbf16, #tpu.memory_space<vmem>>, vector<16x48xbf16>
    %cst = arith.constant dense<0.000000e+00> : vector<256x48xf32>
    %8 = tpu.matmul %6, %7, %cst {dimension_numbers = #tpu.dot_dimension_numbers<[0], [0], [1], [1], [0, 1, 1, 1], [], []>} : vector<16x256xbf16>, vector<16x48xbf16>, vector<256x48xf32> -> vector<256x48xf32>
    %cst_3 = arith.constant 0.000000e+00 : f32
    %9 = vector.broadcast %cst_3 : f32 to vector<1x48xf32>
    %cst_4 = arith.constant 0.000000e+00 : f32
    %10 = vector.broadcast %cst_4 : f32 to vector<1x48xf32>
    %11 = vector.extract_strided_slice %8 {offsets = [0, 0], sizes = [64, 48], strides = [1, 1]} : vector<256x48xf32> to vector<64x48xf32>
    %cst_5 = arith.constant dense<0.000000e+00> : vector<48xf32>
    %12 = vector.multi_reduction <add>, %11, %cst_5 [0] : vector<64x48xf32> to vector<48xf32>
    %13 = vector.shape_cast %12 : vector<48xf32> to vector<1x48xf32>
    %14 = arith.addf %9, %13 : vector<1x48xf32>
    %15 = arith.mulf %11, %11 : vector<64x48xf32>
    %cst_6 = arith.constant dense<0.000000e+00> : vector<48xf32>
    %16 = vector.multi_reduction <add>, %15, %cst_6 [0] : vector<64x48xf32> to vector<48xf32>
    %17 = vector.shape_cast %16 : vector<48xf32> to vector<1x48xf32>
    %18 = arith.addf %10, %17 : vector<1x48xf32>
    %19 = vector.extract_strided_slice %8 {offsets = [64, 0], sizes = [64, 48], strides = [1, 1]} : vector<256x48xf32> to vector<64x48xf32>
    %cst_7 = arith.constant dense<0.000000e+00> : vector<48xf32>
    %20 = vector.multi_reduction <add>, %19, %cst_7 [0] : vector<64x48xf32> to vector<48xf32>
    %21 = vector.shape_cast %20 : vector<48xf32> to vector<1x48xf32>
    %22 = arith.addf %14, %21 : vector<1x48xf32>
    %23 = arith.mulf %19, %19 : vector<64x48xf32>
    %cst_8 = arith.constant dense<0.000000e+00> : vector<48xf32>
    %24 = vector.multi_reduction <add>, %23, %cst_8 [0] : vector<64x48xf32> to vector<48xf32>
    %25 = vector.shape_cast %24 : vector<48xf32> to vector<1x48xf32>
    %26 = arith.addf %18, %25 : vector<1x48xf32>
    %27 = vector.extract_strided_slice %8 {offsets = [128, 0], sizes = [64, 48], strides = [1, 1]} : vector<256x48xf32> to vector<64x48xf32>
    %cst_9 = arith.constant dense<0.000000e+00> : vector<48xf32>
    %28 = vector.multi_reduction <add>, %27, %cst_9 [0] : vector<64x48xf32> to vector<48xf32>
    %29 = vector.shape_cast %28 : vector<48xf32> to vector<1x48xf32>
    %30 = arith.addf %22, %29 : vector<1x48xf32>
    %31 = arith.mulf %27, %27 : vector<64x48xf32>
    %cst_10 = arith.constant dense<0.000000e+00> : vector<48xf32>
    %32 = vector.multi_reduction <add>, %31, %cst_10 [0] : vector<64x48xf32> to vector<48xf32>
    %33 = vector.shape_cast %32 : vector<48xf32> to vector<1x48xf32>
    %34 = arith.addf %26, %33 : vector<1x48xf32>
    %35 = vector.extract_strided_slice %8 {offsets = [192, 0], sizes = [64, 48], strides = [1, 1]} : vector<256x48xf32> to vector<64x48xf32>
    %cst_11 = arith.constant dense<0.000000e+00> : vector<48xf32>
    %36 = vector.multi_reduction <add>, %35, %cst_11 [0] : vector<64x48xf32> to vector<48xf32>
    %37 = vector.shape_cast %36 : vector<48xf32> to vector<1x48xf32>
    %38 = arith.addf %30, %37 : vector<1x48xf32>
    %39 = arith.mulf %35, %35 : vector<64x48xf32>
    %cst_12 = arith.constant dense<0.000000e+00> : vector<48xf32>
    %40 = vector.multi_reduction <add>, %39, %cst_12 [0] : vector<64x48xf32> to vector<48xf32>
    %41 = vector.shape_cast %40 : vector<48xf32> to vector<1x48xf32>
    %42 = arith.addf %34, %41 : vector<1x48xf32>
    %cst_13 = arith.constant 3.906250e-03 : f32
    %43 = vector.broadcast %cst_13 : f32 to vector<1x48xf32>
    %44 = arith.mulf %38, %43 : vector<1x48xf32>
    %cst_14 = arith.constant 3.906250e-03 : f32
    %45 = vector.broadcast %cst_14 : f32 to vector<1x48xf32>
    %46 = arith.mulf %42, %45 : vector<1x48xf32>
    %47 = arith.mulf %44, %44 : vector<1x48xf32>
    %48 = arith.subf %46, %47 : vector<1x48xf32>
    %cst_15 = arith.constant 0.000000e+00 : f32
    %49 = vector.broadcast %cst_15 : f32 to vector<1x48xf32>
    %50 = arith.maximumf %48, %49 : vector<1x48xf32>
    %c9 = arith.constant 9 : index
    %c0_16 = arith.constant 0 : index
    %51 = vector.load %arg2[%c9, %c0_16] : memref<13x48xf32, #tpu.memory_space<vmem>>, vector<1x48xf32>
    %cst_17 = arith.constant 9.99999974E-6 : f32
    %52 = vector.broadcast %cst_17 : f32 to vector<1x48xf32>
    %53 = arith.addf %50, %52 : vector<1x48xf32>
    %54 = math.rsqrt %53 : vector<1x48xf32>
    %55 = arith.mulf %51, %54 : vector<1x48xf32>
    %c10 = arith.constant 10 : index
    %c0_18 = arith.constant 0 : index
    %56 = vector.load %arg2[%c10, %c0_18] : memref<13x48xf32, #tpu.memory_space<vmem>>, vector<1x48xf32>
    %57 = arith.mulf %44, %55 : vector<1x48xf32>
    %58 = arith.subf %56, %57 : vector<1x48xf32>
    %59 = vector.broadcast %55 : vector<1x48xf32> to vector<256x48xf32>
    %60 = arith.mulf %8, %59 : vector<256x48xf32>
    %61 = vector.broadcast %58 : vector<1x48xf32> to vector<256x48xf32>
    %62 = arith.addf %60, %61 : vector<256x48xf32>
    %cst_19 = arith.constant 0.000000e+00 : f32
    %63 = vector.broadcast %cst_19 : f32 to vector<256x48xf32>
    %64 = arith.maximumf %62, %63 : vector<256x48xf32>
    %65 = vector.shape_cast %64 : vector<256x48xf32> to vector<16x16x48xf32>
    %c0_20 = arith.constant 0 : index
    %c0_21 = arith.constant 0 : index
    %c0_22 = arith.constant 0 : index
    %66 = vector.load %arg4[%c0_20, %c0_21, %c0_22] : memref<16x16x48xf32, #tpu.memory_space<vmem>>, vector<16x16x48xf32>
    tpu.vector_store %arg4[%c0_20, %c0_21, %c0_22], %65 {strides = array<i32>} : memref<16x16x48xf32, #tpu.memory_space<vmem>>, vector<16x16x48xf32>,
    %cst_23 = arith.constant 0.000000e+00 : f32
    %67 = vector.broadcast %cst_23 : f32 to vector<1x8x48xf32>
    %c0_24 = arith.constant 0 : index
    %c0_25 = arith.constant 0 : index
    %c0_26 = arith.constant 0 : index
    %68 = vector.load %arg5[%c0_24, %c0_25, %c0_26] : memref<17x8x48xf32, #tpu.memory_space<vmem>>, vector<1x8x48xf32>
    tpu.vector_store %arg5[%c0_24, %c0_25, %c0_26], %67 {strides = array<i32>} : memref<17x8x48xf32, #tpu.memory_space<vmem>>, vector<1x8x48xf32>,
    %c0_27 = arith.constant 0 : index
    %c0_28 = arith.constant 0 : index
    %c0_29 = arith.constant 0 : index
    %69 = tpu.strided_load %arg4[%c0_27, %c0_28, %c0_29] {strides = array<i32: 1, 2, 1>} : memref<16x16x48xf32, #tpu.memory_space<vmem>>, vector<16x8x48xf32>
    %c1 = arith.constant 1 : index
    %c0_30 = arith.constant 0 : index
    %c0_31 = arith.constant 0 : index
    %70 = vector.load %arg5[%c1, %c0_30, %c0_31] : memref<17x8x48xf32, #tpu.memory_space<vmem>>, vector<16x8x48xf32>
    tpu.vector_store %arg5[%c1, %c0_30, %c0_31], %69 {strides = array<i32>} : memref<17x8x48xf32, #tpu.memory_space<vmem>>, vector<16x8x48xf32>,
    %cst_32 = arith.constant 0.000000e+00 : f32
    %71 = vector.broadcast %cst_32 : f32 to vector<1x9x48xf32>
    %c0_33 = arith.constant 0 : index
    %c0_34 = arith.constant 0 : index
    %c0_35 = arith.constant 0 : index
    %72 = vector.load %arg6[%c0_33, %c0_34, %c0_35] : memref<17x9x48xf32, #tpu.memory_space<vmem>>, vector<1x9x48xf32>
    tpu.vector_store %arg6[%c0_33, %c0_34, %c0_35], %71 {strides = array<i32>} : memref<17x9x48xf32, #tpu.memory_space<vmem>>, vector<1x9x48xf32>,
    %cst_36 = arith.constant 0.000000e+00 : f32
    %73 = vector.broadcast %cst_36 : f32 to vector<17x1x48xf32>
    %c0_37 = arith.constant 0 : index
    %c0_38 = arith.constant 0 : index
    %c0_39 = arith.constant 0 : index
    %74 = vector.load %arg6[%c0_37, %c0_38, %c0_39] : memref<17x9x48xf32, #tpu.memory_space<vmem>>, vector<17x1x48xf32>
    tpu.vector_store %arg6[%c0_37, %c0_38, %c0_39], %73 {strides = array<i32>} : memref<17x9x48xf32, #tpu.memory_space<vmem>>, vector<17x1x48xf32>,
    %c0_40 = arith.constant 0 : index
    %c1_41 = arith.constant 1 : index
    %c0_42 = arith.constant 0 : index
    %75 = tpu.strided_load %arg4[%c0_40, %c1_41, %c0_42] {strides = array<i32: 1, 2, 1>} : memref<16x16x48xf32, #tpu.memory_space<vmem>>, vector<16x8x48xf32>
    %c1_43 = arith.constant 1 : index
    %c1_44 = arith.constant 1 : index
    %c0_45 = arith.constant 0 : index
    %76 = vector.load %arg6[%c1_43, %c1_44, %c0_45] : memref<17x9x48xf32, #tpu.memory_space<vmem>>, vector<16x8x48xf32>
    tpu.vector_store %arg6[%c1_43, %c1_44, %c0_45], %75 {strides = array<i32>} : memref<17x9x48xf32, #tpu.memory_space<vmem>>, vector<16x8x48xf32>,
    %cst_46 = arith.constant 0.000000e+00 : f32
    %77 = vector.broadcast %cst_46 : f32 to vector<8x8x48xf32>
    %c0_47 = arith.constant 0 : index
    %c0_48 = arith.constant 0 : index
    %c0_49 = arith.constant 0 : index
    %78 = tpu.strided_load %arg5[%c0_47, %c0_48, %c0_49] {strides = array<i32: 2, 1, 1>} : memref<17x8x48xf32, #tpu.memory_space<vmem>>, vector<8x8x48xf32>
    %c0_50 = arith.constant 0 : index
    %c0_51 = arith.constant 0 : index
    %c0_52 = arith.constant 0 : index
    %79 = tpu.strided_load %arg6[%c0_50, %c0_51, %c0_52] {strides = array<i32: 2, 1, 1>} : memref<17x9x48xf32, #tpu.memory_space<vmem>>, vector<8x9x48xf32>
    %80 = vector.extract_strided_slice %79 {offsets = [0, 0, 0], sizes = [8, 8, 48], strides = [1, 1, 1]} : vector<8x9x48xf32> to vector<8x8x48xf32>
    %c0_53 = arith.constant 0 : index
    %c0_54 = arith.constant 0 : index
    %81 = vector.load %arg2[%c0_53, %c0_54] : memref<13x48xf32, #tpu.memory_space<vmem>>, vector<1x48xf32>
    %82 = vector.shape_cast %81 : vector<1x48xf32> to vector<48xf32>
    %83 = vector.shape_cast %82 : vector<48xf32> to vector<1x1x48xf32>
    %84 = vector.broadcast %83 : vector<1x1x48xf32> to vector<8x8x48xf32>
    %85 = arith.mulf %80, %84 : vector<8x8x48xf32>
    %86 = arith.addf %77, %85 : vector<8x8x48xf32>
    %c1_55 = arith.constant 1 : index
    %c0_56 = arith.constant 0 : index
    %87 = vector.load %arg2[%c1_55, %c0_56] : memref<13x48xf32, #tpu.memory_space<vmem>>, vector<1x48xf32>
    %88 = vector.shape_cast %87 : vector<1x48xf32> to vector<48xf32>
    %89 = vector.shape_cast %88 : vector<48xf32> to vector<1x1x48xf32>
    %90 = vector.broadcast %89 : vector<1x1x48xf32> to vector<8x8x48xf32>
    %91 = arith.mulf %78, %90 : vector<8x8x48xf32>
    %92 = arith.addf %86, %91 : vector<8x8x48xf32>
    %93 = vector.extract_strided_slice %79 {offsets = [0, 1, 0], sizes = [8, 8, 48], strides = [1, 1, 1]} : vector<8x9x48xf32> to vector<8x8x48xf32>
    %c2 = arith.constant 2 : index
    %c0_57 = arith.constant 0 : index
    %94 = vector.load %arg2[%c2, %c0_57] : memref<13x48xf32, #tpu.memory_space<vmem>>, vector<1x48xf32>
    %95 = vector.shape_cast %94 : vector<1x48xf32> to vector<48xf32>
    %96 = vector.shape_cast %95 : vector<48xf32> to vector<1x1x48xf32>
    %97 = vector.broadcast %96 : vector<1x1x48xf32> to vector<8x8x48xf32>
    %98 = arith.mulf %93, %97 : vector<8x8x48xf32>
    %99 = arith.addf %92, %98 : vector<8x8x48xf32>
    %c1_58 = arith.constant 1 : index
    %c0_59 = arith.constant 0 : index
    %c0_60 = arith.constant 0 : index
    %100 = tpu.strided_load %arg5[%c1_58, %c0_59, %c0_60] {strides = array<i32: 2, 1, 1>} : memref<17x8x48xf32, #tpu.memory_space<vmem>>, vector<8x8x48xf32>
    %c1_61 = arith.constant 1 : index
    %c0_62 = arith.constant 0 : index
    %c0_63 = arith.constant 0 : index
    %101 = tpu.strided_load %arg6[%c1_61, %c0_62, %c0_63] {strides = array<i32: 2, 1, 1>} : memref<17x9x48xf32, #tpu.memory_space<vmem>>, vector<8x9x48xf32>
    %102 = vector.extract_strided_slice %101 {offsets = [0, 0, 0], sizes = [8, 8, 48], strides = [1, 1, 1]} : vector<8x9x48xf32> to vector<8x8x48xf32>
    %c3 = arith.constant 3 : index
    %c0_64 = arith.constant 0 : index
    %103 = vector.load %arg2[%c3, %c0_64] : memref<13x48xf32, #tpu.memory_space<vmem>>, vector<1x48xf32>
    %104 = vector.shape_cast %103 : vector<1x48xf32> to vector<48xf32>
    %105 = vector.shape_cast %104 : vector<48xf32> to vector<1x1x48xf32>
    %106 = vector.broadcast %105 : vector<1x1x48xf32> to vector<8x8x48xf32>
    %107 = arith.mulf %102, %106 : vector<8x8x48xf32>
    %108 = arith.addf %99, %107 : vector<8x8x48xf32>
    %c4 = arith.constant 4 : index
    %c0_65 = arith.constant 0 : index
    %109 = vector.load %arg2[%c4, %c0_65] : memref<13x48xf32, #tpu.memory_space<vmem>>, vector<1x48xf32>
    %110 = vector.shape_cast %109 : vector<1x48xf32> to vector<48xf32>
    %111 = vector.shape_cast %110 : vector<48xf32> to vector<1x1x48xf32>
    %112 = vector.broadcast %111 : vector<1x1x48xf32> to vector<8x8x48xf32>
    %113 = arith.mulf %100, %112 : vector<8x8x48xf32>
    %114 = arith.addf %108, %113 : vector<8x8x48xf32>
    %115 = vector.extract_strided_slice %101 {offsets = [0, 1, 0], sizes = [8, 8, 48], strides = [1, 1, 1]} : vector<8x9x48xf32> to vector<8x8x48xf32>
    %c5 = arith.constant 5 : index
    %c0_66 = arith.constant 0 : index
    %116 = vector.load %arg2[%c5, %c0_66] : memref<13x48xf32, #tpu.memory_space<vmem>>, vector<1x48xf32>
    %117 = vector.shape_cast %116 : vector<1x48xf32> to vector<48xf32>
    %118 = vector.shape_cast %117 : vector<48xf32> to vector<1x1x48xf32>
    %119 = vector.broadcast %118 : vector<1x1x48xf32> to vector<8x8x48xf32>
    %120 = arith.mulf %115, %119 : vector<8x8x48xf32>
    %121 = arith.addf %114, %120 : vector<8x8x48xf32>
    %c2_67 = arith.constant 2 : index
    %c0_68 = arith.constant 0 : index
    %c0_69 = arith.constant 0 : index
    %122 = tpu.strided_load %arg5[%c2_67, %c0_68, %c0_69] {strides = array<i32: 2, 1, 1>} : memref<17x8x48xf32, #tpu.memory_space<vmem>>, vector<8x8x48xf32>
    %c2_70 = arith.constant 2 : index
    %c0_71 = arith.constant 0 : index
    %c0_72 = arith.constant 0 : index
    %123 = tpu.strided_load %arg6[%c2_70, %c0_71, %c0_72] {strides = array<i32: 2, 1, 1>} : memref<17x9x48xf32, #tpu.memory_space<vmem>>, vector<8x9x48xf32>
    %124 = vector.extract_strided_slice %123 {offsets = [0, 0, 0], sizes = [8, 8, 48], strides = [1, 1, 1]} : vector<8x9x48xf32> to vector<8x8x48xf32>
    %c6 = arith.constant 6 : index
    %c0_73 = arith.constant 0 : index
    %125 = vector.load %arg2[%c6, %c0_73] : memref<13x48xf32, #tpu.memory_space<vmem>>, vector<1x48xf32>
    %126 = vector.shape_cast %125 : vector<1x48xf32> to vector<48xf32>
    %127 = vector.shape_cast %126 : vector<48xf32> to vector<1x1x48xf32>
    %128 = vector.broadcast %127 : vector<1x1x48xf32> to vector<8x8x48xf32>
    %129 = arith.mulf %124, %128 : vector<8x8x48xf32>
    %130 = arith.addf %121, %129 : vector<8x8x48xf32>
    %c7 = arith.constant 7 : index
    %c0_74 = arith.constant 0 : index
    %131 = vector.load %arg2[%c7, %c0_74] : memref<13x48xf32, #tpu.memory_space<vmem>>, vector<1x48xf32>
    %132 = vector.shape_cast %131 : vector<1x48xf32> to vector<48xf32>
    %133 = vector.shape_cast %132 : vector<48xf32> to vector<1x1x48xf32>
    %134 = vector.broadcast %133 : vector<1x1x48xf32> to vector<8x8x48xf32>
    %135 = arith.mulf %122, %134 : vector<8x8x48xf32>
    %136 = arith.addf %130, %135 : vector<8x8x48xf32>
    %137 = vector.extract_strided_slice %123 {offsets = [0, 1, 0], sizes = [8, 8, 48], strides = [1, 1, 1]} : vector<8x9x48xf32> to vector<8x8x48xf32>
    %c8 = arith.constant 8 : index
    %c0_75 = arith.constant 0 : index
    %138 = vector.load %arg2[%c8, %c0_75] : memref<13x48xf32, #tpu.memory_space<vmem>>, vector<1x48xf32>
    %139 = vector.shape_cast %138 : vector<1x48xf32> to vector<48xf32>
    %140 = vector.shape_cast %139 : vector<48xf32> to vector<1x1x48xf32>
    %141 = vector.broadcast %140 : vector<1x1x48xf32> to vector<8x8x48xf32>
    %142 = arith.mulf %137, %141 : vector<8x8x48xf32>
    %143 = arith.addf %136, %142 : vector<8x8x48xf32>
    %144 = vector.shape_cast %143 : vector<8x8x48xf32> to vector<64x48xf32>
    %cst_76 = arith.constant dense<0.000000e+00> : vector<48xf32>
    %145 = vector.multi_reduction <add>, %144, %cst_76 [0] : vector<64x48xf32> to vector<48xf32>
    %146 = vector.shape_cast %145 : vector<48xf32> to vector<1x48xf32>
    %147 = arith.mulf %144, %144 : vector<64x48xf32>
    %cst_77 = arith.constant dense<0.000000e+00> : vector<48xf32>
    %148 = vector.multi_reduction <add>, %147, %cst_77 [0] : vector<64x48xf32> to vector<48xf32>
    %149 = vector.shape_cast %148 : vector<48xf32> to vector<1x48xf32>
    %cst_78 = arith.constant 1.562500e-02 : f32
    %150 = vector.broadcast %cst_78 : f32 to vector<1x48xf32>
    %151 = arith.mulf %146, %150 : vector<1x48xf32>
    %cst_79 = arith.constant 1.562500e-02 : f32
    %152 = vector.broadcast %cst_79 : f32 to vector<1x48xf32>
    %153 = arith.mulf %149, %152 : vector<1x48xf32>
    %154 = arith.mulf %151, %151 : vector<1x48xf32>
    %155 = arith.subf %153, %154 : vector<1x48xf32>
    %cst_80 = arith.constant 0.000000e+00 : f32
    %156 = vector.broadcast %cst_80 : f32 to vector<1x48xf32>
    %157 = arith.maximumf %155, %156 : vector<1x48xf32>
    %c11 = arith.constant 11 : index
    %c0_81 = arith.constant 0 : index
    %158 = vector.load %arg2[%c11, %c0_81] : memref<13x48xf32, #tpu.memory_space<vmem>>, vector<1x48xf32>
    %cst_82 = arith.constant 9.99999974E-6 : f32
    %159 = vector.broadcast %cst_82 : f32 to vector<1x48xf32>
    %160 = arith.addf %157, %159 : vector<1x48xf32>
    %161 = math.rsqrt %160 : vector<1x48xf32>
    %162 = arith.mulf %158, %161 : vector<1x48xf32>
    %c12 = arith.constant 12 : index
    %c0_83 = arith.constant 0 : index
    %163 = vector.load %arg2[%c12, %c0_83] : memref<13x48xf32, #tpu.memory_space<vmem>>, vector<1x48xf32>
    %164 = arith.mulf %151, %162 : vector<1x48xf32>
    %165 = arith.subf %163, %164 : vector<1x48xf32>
    %166 = vector.broadcast %162 : vector<1x48xf32> to vector<64x48xf32>
    %167 = arith.mulf %144, %166 : vector<64x48xf32>
    %168 = vector.broadcast %165 : vector<1x48xf32> to vector<64x48xf32>
    %169 = arith.addf %167, %168 : vector<64x48xf32>
    %cst_84 = arith.constant 0.000000e+00 : f32
    %170 = vector.broadcast %cst_84 : f32 to vector<64x48xf32>
    %171 = arith.maximumf %169, %170 : vector<64x48xf32>
    %cst_85 = arith.constant dense<0.000000e+00> : vector<48x64xf32>
    %172 = tpu.matmul %4, %171, %cst_85 {dimension_numbers = #tpu.dot_dimension_numbers<[1], [1], [0], [0], [0, 0, 1, 0], [], []>, precision = #tpu.contract_precision<fp32>} : vector<48x48xf32>, vector<64x48xf32>, vector<48x64xf32> -> vector<48x64xf32>
    %c0_86 = arith.constant 0 : index
    %c0_87 = arith.constant 0 : index
    %173 = vector.load %arg3[%c0_86, %c0_87] : memref<48x64xf32, #tpu.memory_space<vmem>>, vector<48x64xf32>
    tpu.vector_store %arg3[%c0_86, %c0_87], %172 {strides = array<i32>} : memref<48x64xf32, #tpu.memory_space<vmem>>, vector<48x64xf32>,
    return
  }
}

</mosaic_0001>

<llo_original>
// kernel: forward_prepared.1
$region0: #{forward_prepared.1}
  #allocation0 [shape = 'u32[]', space=smem, size = 0x4, offset = 0x4, fixed_abs, tag = 'smem constant byte address 0x4 - core index']
  #allocation1 [shape = 'u32[144,128]{1,0:T(1,128)}', space=vmem, size = 0x12000, scoped, tag = 'internal scratch']
  #allocation2 [shape = 'f32[16,16,48]{2,1,0:T(8,128)}', space=vmem, size = 0x20000, scoped, tag = 'scratch operand']
  #allocation3 [shape = 'f32[17,8,48]{2,1,0:T(8,128)}', space=vmem, size = 0x11000, scoped, tag = 'scratch operand']
  #allocation4 [shape = 'f32[17,9,48]{2,1,0:T(8,128)}', space=vmem, size = 0x22000, scoped, tag = 'scratch operand']
  %s0 = inlined_call_operand.vmem [shape: f32[16,256], index: 0, kind: input, shape index: {}]
  %s1 = inlined_call_operand.vmem [shape: bf16[16,48], index: 1, kind: input, shape index: {}]
  %s2 = inlined_call_operand.vmem [shape: f32[13,48], index: 2, kind: input, shape index: {}]
  %s3 = inlined_call_operand.vmem [shape: f32[48,64], index: 3, kind: output, shape index: {}]
  %s4 = sld [smem:[#allocation0]]
  $region22: #{forward_prepared.1} parent=0
    _
  %s6 = ssub.s32 1, %s4
  %s7 = scalar_select 0, %s6, %s4
  // Predicated region
  $region2: #{forward_prepared.1} parent=0 // pred_check
    _
  $region3: #{forward_prepared.1} parent=0 // pred_check_branch
    %9 = sbr.rel (0) target = $region5
  $region4: #{forward_prepared.1} parent=0 // pred_region
    _
  $region5: #{forward_prepared.1} parent=0 // pred_fallthru
    _
  // Predicated region
  $region6: #{forward_prepared.1} parent=0 // pred_check
    _
  $region7: #{forward_prepared.1} parent=0 // pred_check_branch
    %11 = sbr.rel (0) target = $region9
  $region8: #{forward_prepared.1} parent=0 // pred_region
    _
  $region9: #{forward_prepared.1} parent=0 // pred_fallthru
    _
  // Predicated region
  $region10: #{forward_prepared.1} parent=0 // pred_check
    _
  $region11: #{forward_prepared.1} parent=0 // pred_check_branch
    %13 = sbr.rel (0) target = $region13
  $region12: #{forward_prepared.1} parent=0 // pred_region
    _
  $region13: #{forward_prepared.1} parent=0 // pred_fallthru
    _
  %v15 = vlaneseq
  %v16 = vshrl.u32 %v15, 7
  %v17 = vadd.s32 %v16, 8
  %v18 = vadd.s32 %v16, 16
  %v19 = vadd.s32 %v16, 24
  %v20 = vadd.s32 %v16, 32
  %v21 = vadd.s32 %v16, 40
  %v22 = vlaneseq
  %v23 = vand.u32 %v22, 127
  %vm24 = vcmp.eq.s32.totalorder %v16, %v23
  %vm25 = vcmp.eq.s32.totalorder %v17, %v23
  %vm26 = vcmp.eq.s32.totalorder %v18, %v23
  %vm27 = vcmp.eq.s32.totalorder %v19, %v23
  %vm28 = vcmp.eq.s32.totalorder %v20, %v23
  %vm29 = vcmp.eq.s32.totalorder %v21, %v23
  %v30 = vsel %vm24, 1, 0
  %v31 = vsel %vm25, 1, 0
  %v32 = vsel %vm26, 1, 0
  %v33 = vsel %vm27, 1, 0
  %v34 = vsel %vm28, 1, 0
  %v35 = vsel %vm29, 1, 0
  %v36 = vcvt.s32.f32 %v30
  %v37 = vcvt.s32.f32 %v31
  %v38 = vcvt.s32.f32 %v32
  %v39 = vcvt.s32.f32 %v33
  %v40 = vcvt.s32.f32 %v34
  %v41 = vcvt.s32.f32 %v35
  %v42 = vld [vmem:[%s0] sm:$0xff]
  %v43 = vld [vmem:[%s0 + $0x8] sm:$0xff]
  %v44 = vld [vmem:[%s0 + $0x10] sm:$0xff]
  %v45 = vld [vmem:[%s0 + $0x18] sm:$0xff]
  %v46 = vpack.c.bf16 %v44, %v42
  %v47 = vpack.c.bf16 %v45, %v43
  %v48 = vld [vmem:[%s1] sm:$0xf]
  %v49 = vld [vmem:[%s1 + $0x4] sm:$0xf]
  %50 = vxpose.xlu0.c.b16.start [1/8] %v46, 128
  %51 = vxpose.xlu0.c.b16.cont [2/8] 0, 128
  %52 = vxpose.xlu0.c.b16.cont [3/8] 0, 128
  %53 = vxpose.xlu0.c.b16.cont [4/8] 0, 128
  %54 = vxpose.xlu0.c.b16.cont [5/8] 0, 128
  %55 = vxpose.xlu0.c.b16.cont [6/8] 0, 128
  %56 = vxpose.xlu0.c.b16.cont [7/8] 0, 128
  %57 = vxpose.xlu0.c.b16.end [8/8] 0, 128
  %v58 = vpop.trf.xlu0
  %v59 = vpop.trf.xlu0
  %v60 = vpop.trf.xlu0
  %v61 = vpop.trf.xlu0
  %v62 = vpop.trf.xlu0
  %v63 = vpop.trf.xlu0
  %v64 = vpop.trf.xlu0
  %v65 = vpop.trf.xlu0
  %66 = vxpose.xlu0.c.b16.start [1/8] %v47, 128
  %67 = vxpose.xlu0.c.b16.cont [2/8] 0, 128
  %68 = vxpose.xlu0.c.b16.cont [3/8] 0, 128
  %69 = vxpose.xlu0.c.b16.cont [4/8] 0, 128
  %70 = vxpose.xlu0.c.b16.cont [5/8] 0, 128
  %71 = vxpose.xlu0.c.b16.cont [6/8] 0, 128
  %72 = vxpose.xlu0.c.b16.cont [7/8] 0, 128
  %73 = vxpose.xlu0.c.b16.end [8/8] 0, 128
  %v74 = vpop.trf.xlu0
  %v75 = vpop.trf.xlu0
  %v76 = vpop.trf.xlu0
  %v77 = vpop.trf.xlu0
  %v78 = vpop.trf.xlu0
  %v79 = vpop.trf.xlu0
  %v80 = vpop.trf.xlu0
  %v81 = vpop.trf.xlu0
  %v84 = vunpack.c.l.b16 %v48
  %v85 = vunpack.c.l.b16 %v49
  %v86 = vpack.c.b16 %v85, %v84
  %vm88 = vcmask 130048
  %v90 = vsel %vm88, %v58, 0
  %v93 = vsel %vm88, %v59, 0
  %v96 = vsel %vm88, %v60, 0
  %v99 = vsel %vm88, %v61, 0
  %v102 = vsel %vm88, %v62, 0
  %v105 = vsel %vm88, %v63, 0
  %v108 = vsel %vm88, %v64, 0
  %v111 = vsel %vm88, %v65, 0
  %v114 = vsel %vm88, %v74, 0
  %v117 = vsel %vm88, %v75, 0
  %v120 = vsel %vm88, %v76, 0
  %v123 = vsel %vm88, %v77, 0
  %v126 = vsel %vm88, %v78, 0
  %v129 = vsel %vm88, %v79, 0
  %v132 = vsel %vm88, %v80, 0
  %v135 = vsel %vm88, %v81, 0
  %137 = vmatprep.subr.bf16.mxu0 0
  %138 = vmatpush1.bf16.msra.mxu0 %v86
  %139 = vmatprep.subr.bf16.mxu0 0
  %140 = vmatpush1.bf16.msra.mxu0 0
  %141 = vmatprep.subr.bf16.mxu0 0
  %142 = vmatpush1.bf16.msra.mxu0 0
  %143 = vmatprep.subr.bf16.mxu0 0
  %144 = vmatpush1.bf16.msra.mxu0 0
  %145 = vmatprep.subr.bf16.mxu0 0
  %146 = vmatpush1.bf16.msra.mxu0 0
  %147 = vmatprep.subr.bf16.mxu0 0
  %148 = vmatpush1.bf16.msra.mxu0 0
  %149 = vmatprep.subr.bf16.mxu0 0
  %150 = vmatpush1.bf16.msra.mxu0 0
  %151 = vmatprep.subr.bf16.mxu0 0
  %152 = vmatpush1.bf16.msra.mxu0 0
  %153 = vmatprep.subr.bf16.mxu0 0
  %154 = vmatpush1.bf16.msra.mxu0 0
  %155 = vmatprep.subr.bf16.mxu0 0
  %156 = vmatpush1.bf16.msra.mxu0 0
  %157 = vmatprep.subr.bf16.mxu0 0
  %158 = vmatpush1.bf16.msra.mxu0 0
  %159 = vmatprep.subr.bf16.mxu0 0
  %160 = vmatpush1.bf16.msra.mxu0 0
  %161 = vmatprep.subr.bf16.mxu0 0
  %162 = vmatpush1.bf16.msra.mxu0 0
  %163 = vmatprep.subr.bf16.mxu0 0
  %164 = vmatpush1.bf16.msra.mxu0 0
  %165 = vmatprep.subr.bf16.mxu0 0
  %166 = vmatpush1.bf16.msra.mxu0 0
  %167 = vmatprep.subr.bf16.mxu0 0
  %168 = vmatpush1.bf16.msra.mxu0 0
  %169 = vmatprep.mubr.bf16.mxu0 0
  %170 = vmatmul.mubr.bf16.gmra.mrb[0].mxu0 %v90
  %v171 = vpop.f32.mrb[0].mxu0
  %v172 = vadd.f32 0.0, %v171
  %v173 = vpop.f32.mrb[0].mxu0
  %v174 = vpop.f32.mrb[0].mxu0
  %v175 = vadd.f32 0.0, %v174
  %v176 = vpop.f32.mrb[0].mxu0
  %177 = vmatprep.mubr.bf16.mxu0 0
  %178 = vmatmul.mubr.bf16.gmra.mrb[0].mxu0 %v93
  %v179 = vpop.f32.mrb[0].mxu0
  %v180 = vadd.f32 0.0, %v179
  %v181 = vpop.f32.mrb[0].mxu0
  %v182 = vpop.f32.mrb[0].mxu0
  %v183 = vadd.f32 0.0, %v182
  %v184 = vpop.f32.mrb[0].mxu0
  %185 = vmatprep.mubr.bf16.mxu0 0
  %186 = vmatmul.mubr.bf16.gmra.mrb[0].mxu0 %v96
  %v187 = vpop.f32.mrb[0].mxu0
  %v188 = vadd.f32 0.0, %v187
  %v189 = vpop.f32.mrb[0].mxu0
  %v190 = vpop.f32.mrb[0].mxu0
  %v191 = vadd.f32 0.0, %v190
  %v192 = vpop.f32.mrb[0].mxu0
  %193 = vmatprep.mubr.bf16.mxu0 0
  %194 = vmatmul.mubr.bf16.gmra.mrb[0].mxu0 %v99
  %v195 = vpop.f32.mrb[0].mxu0
  %v196 = vadd.f32 0.0, %v195
  %v197 = vpop.f32.mrb[0].mxu0
  %v198 = vpop.f32.mrb[0].mxu0
  %v199 = vadd.f32 0.0, %v198
  %v200 = vpop.f32.mrb[0].mxu0
  %201 = vmatprep.mubr.bf16.mxu0 0
  %202 = vmatmul.mubr.bf16.gmra.mrb[0].mxu0 %v102
  %v203 = vpop.f32.mrb[0].mxu0
  %v204 = vadd.f32 0.0, %v203
  %v205 = vpop.f32.mrb[0].mxu0
  %v206 = vpop.f32.mrb[0].mxu0
  %v207 = vadd.f32 0.0, %v206
  %v208 = vpop.f32.mrb[0].mxu0
  %209 = vmatprep.mubr.bf16.mxu0 0
  %210 = vmatmul.mubr.bf16.gmra.mrb[0].mxu0 %v105
  %v211 = vpop.f32.mrb[0].mxu0
  %v212 = vadd.f32 0.0, %v211
  %v213 = vpop.f32.mrb[0].mxu0
  %v214 = vpop.f32.mrb[0].mxu0
  %v215 = vadd.f32 0.0, %v214
  %v216 = vpop.f32.mrb[0].mxu0
  %217 = vmatprep.mubr.bf16.mxu0 0
  %218 = vmatmul.mubr.bf16.gmra.mrb[0].mxu0 %v108
  %v219 = vpop.f32.mrb[0].mxu0
  %v220 = vadd.f32 0.0, %v219
  %v221 = vpop.f32.mrb[0].mxu0
  %v222 = vpop.f32.mrb[0].mxu0
  %v223 = vadd.f32 0.0, %v222
  %v224 = vpop.f32.mrb[0].mxu0
  %225 = vmatprep.mubr.bf16.mxu0 0
  %226 = vmatmul.mubr.bf16.gmra.mrb[0].mxu0 %v111
  %v227 = vpop.f32.mrb[0].mxu0
  %v228 = vadd.f32 0.0, %v227
  %v229 = vpop.f32.mrb[0].mxu0
  %v230 = vpop.f32.mrb[0].mxu0
  %v231 = vadd.f32 0.0, %v230
  %v232 = vpop.f32.mrb[0].mxu0
  %233 = vmatprep.mubr.bf16.mxu0 0
  %234 = vmatmul.mubr.bf16.gmra.mrb[0].mxu0 %v114
  %v235 = vpop.f32.mrb[0].mxu0
  %v236 = vadd.f32 0.0, %v235
  %v237 = vpop.f32.mrb[0].mxu0
  %v238 = vpop.f32.mrb[0].mxu0
  %v239 = vadd.f32 0.0, %v238
  %v240 = vpop.f32.mrb[0].mxu0
  %241 = vmatprep.mubr.bf16.mxu0 0
  %242 = vmatmul.mubr.bf16.gmra.mrb[0].mxu0 %v117
  %v243 = vpop.f32.mrb[0].mxu0
  %v244 = vadd.f32 0.0, %v243
  %v245 = vpop.f32.mrb[0].mxu0
  %v246 = vpop.f32.mrb[0].mxu0
  %v247 = vadd.f32 0.0, %v246
  %v248 = vpop.f32.mrb[0].mxu0
  %249 = vmatprep.mubr.bf16.mxu0 0
  %250 = vmatmul.mubr.bf16.gmra.mrb[0].mxu0 %v120
  %v251 = vpop.f32.mrb[0].mxu0
  %v252 = vadd.f32 0.0, %v251
  %v253 = vpop.f32.mrb[0].mxu0
  %v254 = vpop.f32.mrb[0].mxu0
  %v255 = vadd.f32 0.0, %v254
  %v256 = vpop.f32.mrb[0].mxu0
  %257 = vmatprep.mubr.bf16.mxu0 0
  %258 = vmatmul.mubr.bf16.gmra.mrb[0].mxu0 %v123
  %v259 = vpop.f32.mrb[0].mxu0
  %v260 = vadd.f32 0.0, %v259
  %v261 = vpop.f32.mrb[0].mxu0
  %v262 = vpop.f32.mrb[0].mxu0
  %v263 = vadd.f32 0.0, %v262
  %v264 = vpop.f32.mrb[0].mxu0
  %265 = vmatprep.mubr.bf16.mxu0 0
  %266 = vmatmul.mubr.bf16.gmra.mrb[0].mxu0 %v126
  %v267 = vpop.f32.mrb[0].mxu0
  %v268 = vadd.f32 0.0, %v267
  %v269 = vpop.f32.mrb[0].mxu0
  %v270 = vpop.f32.mrb[0].mxu0
  %v271 = vadd.f32 0.0, %v270
  %v272 = vpop.f32.mrb[0].mxu0
  %273 = vmatprep.mubr.bf16.mxu0 0
  %274 = vmatmul.mubr.bf16.gmra.mrb[0].mxu0 %v129
  %v275 = vpop.f32.mrb[0].mxu0
  %v276 = vadd.f32 0.0, %v275
  %v277 = vpop.f32.mrb[0].mxu0
  %v278 = vpop.f32.mrb[0].mxu0
  %v279 = vadd.f32 0.0, %v278
  %v280 = vpop.f32.mrb[0].mxu0
  %281 = vmatprep.mubr.bf16.mxu0 0
  %282 = vmatmul.mubr.bf16.gmra.mrb[0].mxu0 %v132
  %v283 = vpop.f32.mrb[0].mxu0
  %v284 = vadd.f32 0.0, %v283
  %v285 = vpop.f32.mrb[0].mxu0
  %v286 = vpop.f32.mrb[0].mxu0
  %v287 = vadd.f32 0.0, %v286
  %v288 = vpop.f32.mrb[0].mxu0
  %289 = vmatprep.mubr.bf16.mxu0 0
  %290 = vmatmul.mubr.bf16.gmra.mrb[0].mxu0 %v135
  %v291 = vpop.f32.mrb[0].mxu0
  %v292 = vadd.f32 0.0, %v291
  %v293 = vpop.f32.mrb[0].mxu0
  %v294 = vpop.f32.mrb[0].mxu0
  %v295 = vadd.f32 0.0, %v294
  %v296 = vpop.f32.mrb[0].mxu0
  %297 = vdwg.mxu0
  %vm298 = vcmask 392192
  %v299 = vsel %vm298, %v172, 0.0
  %v300 = vsel %vm298, %v175, 0.0
  %v301 = vadd.f32 %v299, %v300
  %v302 = vsel %vm298, %v180, 0.0
  %v303 = vadd.f32 %v301, %v302
  %v304 = vsel %vm298, %v183, 0.0
  %v305 = vadd.f32 %v303, %v304
  %v306 = vsel %vm298, %v188, 0.0
  %v307 = vadd.f32 %v305, %v306
  %v308 = vsel %vm298, %v191, 0.0
  %v309 = vadd.f32 %v307, %v308
  %v310 = vsel %vm298, %v196, 0.0
  %v311 = vadd.f32 %v309, %v310
  %v312 = vsel %vm298, %v199, 0.0
  %v313 = vadd.f32 %v311, %v312
  %v314 = vrot.slane %v313, 4
  %v315 = vadd.f32 %v313, %v314
  %v316 = vrot.slane %v315, 2
  %v317 = vadd.f32 %v315, %v316
  %v318 = vrot.slane %v317, 1
  %v319 = vadd.f32 %v317, %v318
  %v320 = vadd.f32 %v319, 0.0
  %v321 = vmul.f32 %v172, %v172
  %v322 = vmul.f32 %v175, %v175
  %v323 = vmul.f32 %v180, %v180
  %v324 = vmul.f32 %v183, %v183
  %v325 = vmul.f32 %v188, %v188
  %v326 = vmul.f32 %v191, %v191
  %v327 = vmul.f32 %v196, %v196
  %v328 = vmul.f32 %v199, %v199
  %v329 = vsel %vm298, %v321, 0.0
  %v330 = vsel %vm298, %v322, 0.0
  %v331 = vadd.f32 %v329, %v330
  %v332 = vsel %vm298, %v323, 0.0
  %v333 = vadd.f32 %v331, %v332
  %v334 = vsel %vm298, %v324, 0.0
  %v335 = vadd.f32 %v333, %v334
  %v336 = vsel %vm298, %v325, 0.0
  %v337 = vadd.f32 %v335, %v336
  %v338 = vsel %vm298, %v326, 0.0
  %v339 = vadd.f32 %v337, %v338
  %v340 = vsel %vm298, %v327, 0.0
  %v341 = vadd.f32 %v339, %v340
  %v342 = vsel %vm298, %v328, 0.0
  %v343 = vadd.f32 %v341, %v342
  %v344 = vrot.slane %v343, 4
  %v345 = vadd.f32 %v343, %v344
  %v346 = vrot.slane %v345, 2
  %v347 = vadd.f32 %v345, %v346
  %v348 = vrot.slane %v347, 1
  %v349 = vadd.f32 %v347, %v348
  %v350 = vadd.f32 %v349, 0.0
  %v351 = vsel %vm298, %v204, 0.0
  %v352 = vsel %vm298, %v207, 0.0
  %v353 = vadd.f32 %v351, %v352
  %v354 = vsel %vm298, %v212, 0.0
  %v355 = vadd.f32 %v353, %v354
  %v356 = vsel %vm298, %v215, 0.0
  %v357 = vadd.f32 %v355, %v356
  %v358 = vsel %vm298, %v220, 0.0
  %v359 = vadd.f32 %v357, %v358
  %v360 = vsel %vm298, %v223, 0.0
  %v361 = vadd.f32 %v359, %v360
  %v362 = vsel %vm298, %v228, 0.0
  %v363 = vadd.f32 %v361, %v362
  %v364 = vsel %vm298, %v231, 0.0
  %v365 = vadd.f32 %v363, %v364
  %v366 = vrot.slane %v365, 4
  %v367 = vadd.f32 %v365, %v366
  %v368 = vrot.slane %v367, 2
  %v369 = vadd.f32 %v367, %v368
  %v370 = vrot.slane %v369, 1
  %v371 = vadd.f32 %v369, %v370
  %v372 = vadd.f32 %v320, %v371
  %v373 = vmul.f32 %v204, %v204
  %v374 = vmul.f32 %v207, %v207
  %v375 = vmul.f32 %v212, %v212
  %v376 = vmul.f32 %v215, %v215
  %v377 = vmul.f32 %v220, %v220
  %v378 = vmul.f32 %v223, %v223
  %v379 = vmul.f32 %v228, %v228
  %v380 = vmul.f32 %v231, %v231
  %v381 = vsel %vm298, %v373, 0.0
  %v382 = vsel %vm298, %v374, 0.0
  %v383 = vadd.f32 %v381, %v382
  %v384 = vsel %vm298, %v375, 0.0
  %v385 = vadd.f32 %v383, %v384
  %v386 = vsel %vm298, %v376, 0.0
  %v387 = vadd.f32 %v385, %v386
  %v388 = vsel %vm298, %v377, 0.0
  %v389 = vadd.f32 %v387, %v388
  %v390 = vsel %vm298, %v378, 0.0
  %v391 = vadd.f32 %v389, %v390
  %v392 = vsel %vm298, %v379, 0.0
  %v393 = vadd.f32 %v391, %v392
  %v394 = vsel %vm298, %v380, 0.0
  %v395 = vadd.f32 %v393, %v394
  %v396 = vrot.slane %v395, 4
  %v397 = vadd.f32 %v395, %v396
  %v398 = vrot.slane %v397, 2
  %v399 = vadd.f32 %v397, %v398
  %v400 = vrot.slane %v399, 1
  %v401 = vadd.f32 %v399, %v400
  %v402 = vadd.f32 %v350, %v401
  %v403 = vsel %vm298, %v236, 0.0
  %v404 = vsel %vm298, %v239, 0.0
  %v405 = vadd.f32 %v403, %v404
  %v406 = vsel %vm298, %v244, 0.0
  %v407 = vadd.f32 %v405, %v406
  %v408 = vsel %vm298, %v247, 0.0
  %v409 = vadd.f32 %v407, %v408
  %v410 = vsel %vm298, %v252, 0.0
  %v411 = vadd.f32 %v409, %v410
  %v412 = vsel %vm298, %v255, 0.0
  %v413 = vadd.f32 %v411, %v412
  %v414 = vsel %vm298, %v260, 0.0
  %v415 = vadd.f32 %v413, %v414
  %v416 = vsel %vm298, %v263, 0.0
  %v417 = vadd.f32 %v415, %v416
  %v418 = vrot.slane %v417, 4
  %v419 = vadd.f32 %v417, %v418
  %v420 = vrot.slane %v419, 2
  %v421 = vadd.f32 %v419, %v420
  %v422 = vrot.slane %v421, 1
  %v423 = vadd.f32 %v421, %v422
  %v424 = vadd.f32 %v372, %v423
  %v425 = vmul.f32 %v236, %v236
  %v426 = vmul.f32 %v239, %v239
  %v427 = vmul.f32 %v244, %v244
  %v428 = vmul.f32 %v247, %v247
  %v429 = vmul.f32 %v252, %v252
  %v430 = vmul.f32 %v255, %v255
  %v431 = vmul.f32 %v260, %v260
  %v432 = vmul.f32 %v263, %v263
  %v433 = vsel %vm298, %v425, 0.0
  %v434 = vsel %vm298, %v426, 0.0
  %v435 = vadd.f32 %v433, %v434
  %v436 = vsel %vm298, %v427, 0.0
  %v437 = vadd.f32 %v435, %v436
  %v438 = vsel %vm298, %v428, 0.0
  %v439 = vadd.f32 %v437, %v438
  %v440 = vsel %vm298, %v429, 0.0
  %v441 = vadd.f32 %v439, %v440
  %v442 = vsel %vm298, %v430, 0.0
  %v443 = vadd.f32 %v441, %v442
  %v444 = vsel %vm298, %v431, 0.0
  %v445 = vadd.f32 %v443, %v444
  %v446 = vsel %vm298, %v432, 0.0
  %v447 = vadd.f32 %v445, %v446
  %v448 = vrot.slane %v447, 4
  %v449 = vadd.f32 %v447, %v448
  %v450 = vrot.slane %v449, 2
  %v451 = vadd.f32 %v449, %v450
  %v452 = vrot.slane %v451, 1
  %v453 = vadd.f32 %v451, %v452
  %v454 = vadd.f32 %v402, %v453
  %v455 = vsel %vm298, %v268, 0.0
  %v456 = vsel %vm298, %v271, 0.0
  %v457 = vadd.f32 %v455, %v456
  %v458 = vsel %vm298, %v276, 0.0
  %v459 = vadd.f32 %v457, %v458
  %v460 = vsel %vm298, %v279, 0.0
  %v461 = vadd.f32 %v459, %v460
  %v462 = vsel %vm298, %v284, 0.0
  %v463 = vadd.f32 %v461, %v462
  %v464 = vsel %vm298, %v287, 0.0
  %v465 = vadd.f32 %v463, %v464
  %v466 = vsel %vm298, %v292, 0.0
  %v467 = vadd.f32 %v465, %v466
  %v468 = vsel %vm298, %v295, 0.0
  %v469 = vadd.f32 %v467, %v468
  %v470 = vrot.slane %v469, 4
  %v471 = vadd.f32 %v469, %v470
  %v472 = vrot.slane %v471, 2
  %v473 = vadd.f32 %v471, %v472
  %v474 = vrot.slane %v473, 1
  %v475 = vadd.f32 %v473, %v474
  %v476 = vadd.f32 %v424, %v475
  %v477 = vmul.f32 %v268, %v268
  %v478 = vmul.f32 %v271, %v271
  %v479 = vmul.f32 %v276, %v276
  %v480 = vmul.f32 %v279, %v279
  %v481 = vmul.f32 %v284, %v284
  %v482 = vmul.f32 %v287, %v287
  %v483 = vmul.f32 %v292, %v292
  %v484 = vmul.f32 %v295, %v295
  %v485 = vsel %vm298, %v477, 0.0
  %v486 = vsel %vm298, %v478, 0.0
  %v487 = vadd.f32 %v485, %v486
  %v488 = vsel %vm298, %v479, 0.0
  %v489 = vadd.f32 %v487, %v488
  %v490 = vsel %vm298, %v480, 0.0
  %v491 = vadd.f32 %v489, %v490
  %v492 = vsel %vm298, %v481, 0.0
  %v493 = vadd.f32 %v491, %v492
  %v494 = vsel %vm298, %v482, 0.0
  %v495 = vadd.f32 %v493, %v494
  %v496 = vsel %vm298, %v483, 0.0
  %v497 = vadd.f32 %v495, %v496
  %v498 = vsel %vm298, %v484, 0.0
  %v499 = vadd.f32 %v497, %v498
  %v500 = vrot.slane %v499, 4
  %v501 = vadd.f32 %v499, %v500
  %v502 = vrot.slane %v501, 2
  %v503 = vadd.f32 %v501, %v502
  %v504 = vrot.slane %v503, 1
  %v505 = vadd.f32 %v503, %v504
  %v506 = vadd.f32 %v454, %v505
  %v507 = vmul.f32 %v476, 0.00390625
  %v508 = vmul.f32 %v506, 0.00390625
  %v509 = vmul.f32 %v507, %v507
  %v510 = vsub.f32 %v508, %v509
  %v511 = vmax.f32 %v510, 0.0
  %v512 = vld [vmem:[%s2 + $0x9] sm:$0x1]
  %v513 = vadd.f32 %v511, 1e-05
  %v514 = vrsqrt.pop %v513
  %v515 = vmul.f32 %v512, %v514
  %v516 = vld [vmem:[%s2 + $0xa] sm:$0x1]
  %v517 = vmul.f32 %v507, %v515
  %v518 = vsub.f32 %v516, %v517
  %v519 = vlaneseq
  %v520 = vshrl.u32 %v519, 7
  %v521 = vsub.s32 0, %v520
  %v522 = vrot.slane %v515, %v521
  %v523 = vmul.f32 %v172, %v522
  %v524 = vmul.f32 %v175, %v522
  %v525 = vmul.f32 %v180, %v522
  %v526 = vmul.f32 %v183, %v522
  %v527 = vmul.f32 %v188, %v522
  %v528 = vmul.f32 %v191, %v522
  %v529 = vmul.f32 %v196, %v522
  %v530 = vmul.f32 %v199, %v522
  %v531 = vmul.f32 %v204, %v522
  %v532 = vmul.f32 %v207, %v522
  %v533 = vmul.f32 %v212, %v522
  %v534 = vmul.f32 %v215, %v522
  %v535 = vmul.f32 %v220, %v522
  %v536 = vmul.f32 %v223, %v522
  %v537 = vmul.f32 %v228, %v522
  %v538 = vmul.f32 %v231, %v522
  %v539 = vmul.f32 %v236, %v522
  %v540 = vmul.f32 %v239, %v522
  %v541 = vmul.f32 %v244, %v522
  %v542 = vmul.f32 %v247, %v522
  %v543 = vmul.f32 %v252, %v522
  %v544 = vmul.f32 %v255, %v522
  %v545 = vmul.f32 %v260, %v522
  %v546 = vmul.f32 %v263, %v522
  %v547 = vmul.f32 %v268, %v522
  %v548 = vmul.f32 %v271, %v522
  %v549 = vmul.f32 %v276, %v522
  %v550 = vmul.f32 %v279, %v522
  %v551 = vmul.f32 %v284, %v522
  %v552 = vmul.f32 %v287, %v522
  %v553 = vmul.f32 %v292, %v522
  %v554 = vmul.f32 %v295, %v522
  %v555 = vlaneseq
  %v556 = vshrl.u32 %v555, 7
  %v557 = vsub.s32 0, %v556
  %v558 = vrot.slane %v518, %v557
  %v559 = vadd.f32 %v523, %v558
  %v560 = vadd.f32 %v524, %v558
  %v561 = vadd.f32 %v525, %v558
  %v562 = vadd.f32 %v526, %v558
  %v563 = vadd.f32 %v527, %v558
  %v564 = vadd.f32 %v528, %v558
  %v565 = vadd.f32 %v529, %v558
  %v566 = vadd.f32 %v530, %v558
  %v567 = vadd.f32 %v531, %v558
  %v568 = vadd.f32 %v532, %v558
  %v569 = vadd.f32 %v533, %v558
  %v570 = vadd.f32 %v534, %v558
  %v571 = vadd.f32 %v535, %v558
  %v572 = vadd.f32 %v536, %v558
  %v573 = vadd.f32 %v537, %v558
  %v574 = vadd.f32 %v538, %v558
  %v575 = vadd.f32 %v539, %v558
  %v576 = vadd.f32 %v540, %v558
  %v577 = vadd.f32 %v541, %v558
  %v578 = vadd.f32 %v542, %v558
  %v579 = vadd.f32 %v543, %v558
  %v580 = vadd.f32 %v544, %v558
  %v581 = vadd.f32 %v545, %v558
  %v582 = vadd.f32 %v546, %v558
  %v583 = vadd.f32 %v547, %v558
  %v584 = vadd.f32 %v548, %v558
  %v585 = vadd.f32 %v549, %v558
  %v586 = vadd.f32 %v550, %v558
  %v587 = vadd.f32 %v551, %v558
  %v588 = vadd.f32 %v552, %v558
  %v589 = vadd.f32 %v553, %v558
  %v590 = vadd.f32 %v554, %v558
  %v591 = vmax.f32 %v559, 0.0
  %v592 = vmax.f32 %v560, 0.0
  %v593 = vmax.f32 %v561, 0.0
  %v594 = vmax.f32 %v562, 0.0
  %v595 = vmax.f32 %v563, 0.0
  %v596 = vmax.f32 %v564, 0.0
  %v597 = vmax.f32 %v565, 0.0
  %v598 = vmax.f32 %v566, 0.0
  %v599 = vmax.f32 %v567, 0.0
  %v600 = vmax.f32 %v568, 0.0
  %v601 = vmax.f32 %v569, 0.0
  %v602 = vmax.f32 %v570, 0.0
  %v603 = vmax.f32 %v571, 0.0
  %v604 = vmax.f32 %v572, 0.0
  %v605 = vmax.f32 %v573, 0.0
  %v606 = vmax.f32 %v574, 0.0
  %v607 = vmax.f32 %v575, 0.0
  %v608 = vmax.f32 %v576, 0.0
  %v609 = vmax.f32 %v577, 0.0
  %v610 = vmax.f32 %v578, 0.0
  %v611 = vmax.f32 %v579, 0.0
  %v612 = vmax.f32 %v580, 0.0
  %v613 = vmax.f32 %v581, 0.0
  %v614 = vmax.f32 %v582, 0.0
  %v615 = vmax.f32 %v583, 0.0
  %v616 = vmax.f32 %v584, 0.0
  %v617 = vmax.f32 %v585, 0.0
  %v618 = vmax.f32 %v586, 0.0
  %v619 = vmax.f32 %v587, 0.0
  %v620 = vmax.f32 %v588, 0.0
  %v621 = vmax.f32 %v589, 0.0
  %v622 = vmax.f32 %v590, 0.0
  %623 = vst.msk [vmem:[#allocation2] sm:$0xff] %vm298, %v591
  %624 = vst.msk [vmem:[#allocation2 + $0x8] sm:$0xff] %vm298, %v592
  %625 = vst.msk [vmem:[#allocation2 + $0x10] sm:$0xff] %vm298, %v593
  %626 = vst.msk [vmem:[#allocation2 + $0x18] sm:$0xff] %vm298, %v594
  %627 = vst.msk [vmem:[#allocation2 + $0x20] sm:$0xff] %vm298, %v595
  %628 = vst.msk [vmem:[#allocation2 + $0x28] sm:$0xff] %vm298, %v596
  %629 = vst.msk [vmem:[#allocation2 + $0x30] sm:$0xff] %vm298, %v597
  %630 = vst.msk [vmem:[#allocation2 + $0x38] sm:$0xff] %vm298, %v598
  %631 = vst.msk [vmem:[#allocation2 + $0x40] sm:$0xff] %vm298, %v599
  %632 = vst.msk [vmem:[#allocation2 + $0x48] sm:$0xff] %vm298, %v600
  %633 = vst.msk [vmem:[#allocation2 + $0x50] sm:$0xff] %vm298, %v601
  %634 = vst.msk [vmem:[#allocation2 + $0x58] sm:$0xff] %vm298, %v602
  %635 = vst.msk [vmem:[#allocation2 + $0x60] sm:$0xff] %vm298, %v603
  %636 = vst.msk [vmem:[#allocation2 + $0x68] sm:$0xff] %vm298, %v604
  %637 = vst.msk [vmem:[#allocation2 + $0x70] sm:$0xff] %vm298, %v605
  %638 = vst.msk [vmem:[#allocation2 + $0x78] sm:$0xff] %vm298, %v606
  %639 = vst.msk [vmem:[#allocation2 + $0x80] sm:$0xff] %vm298, %v607
  %640 = vst.msk [vmem:[#allocation2 + $0x88] sm:$0xff] %vm298, %v608
  %641 = vst.msk [vmem:[#allocation2 + $0x90] sm:$0xff] %vm298, %v609
  %642 = vst.msk [vmem:[#allocation2 + $0x98] sm:$0xff] %vm298, %v610
  %643 = vst.msk [vmem:[#allocation2 + $0xa0] sm:$0xff] %vm298, %v611
  %644 = vst.msk [vmem:[#allocation2 + $0xa8] sm:$0xff] %vm298, %v612
  %645 = vst.msk [vmem:[#allocation2 + $0xb0] sm:$0xff] %vm298, %v613
  %646 = vst.msk [vmem:[#allocation2 + $0xb8] sm:$0xff] %vm298, %v614
  %647 = vst.msk [vmem:[#allocation2 + $0xc0] sm:$0xff] %vm298, %v615
  %648 = vst.msk [vmem:[#allocation2 + $0xc8] sm:$0xff] %vm298, %v616
  %649 = vst.msk [vmem:[#allocation2 + $0xd0] sm:$0xff] %vm298, %v617
  %650 = vst.msk [vmem:[#allocation2 + $0xd8] sm:$0xff] %vm298, %v618
  %651 = vst.msk [vmem:[#allocation2 + $0xe0] sm:$0xff] %vm298, %v619
  %652 = vst.msk [vmem:[#allocation2 + $0xe8] sm:$0xff] %vm298, %v620
  %653 = vst.msk [vmem:[#allocation2 + $0xf0] sm:$0xff] %vm298, %v621
  %654 = vst.msk [vmem:[#allocation2 + $0xf8] sm:$0xff] %vm298, %v622
  %655 = vst.msk [vmem:[#allocation3] sm:$0xff] %vm298, 0.0
  %v656 = vld [vmem:[#allocation2] ss:$2 sm:$0xff]
  %s657 = scalar_lea.vmem [#allocation2], 16
  %v658 = vld [vmem:[%s657] ss:$2 sm:$0xff]
  %s659 = scalar_lea.vmem [#allocation2], 32
  %v660 = vld [vmem:[%s659] ss:$2 sm:$0xff]
  %s661 = scalar_lea.vmem [#allocation2], 48
  %v662 = vld [vmem:[%s661] ss:$2 sm:$0xff]
  %s663 = scalar_lea.vmem [#allocation2], 64
  %v664 = vld [vmem:[%s663] ss:$2 sm:$0xff]
  %s665 = scalar_lea.vmem [#allocation2], 80
  %v666 = vld [vmem:[%s665] ss:$2 sm:$0xff]
  %s667 = scalar_lea.vmem [#allocation2], 96
  %v668 = vld [vmem:[%s667] ss:$2 sm:$0xff]
  %s669 = scalar_lea.vmem [#allocation2], 112
  %v670 = vld [vmem:[%s669] ss:$2 sm:$0xff]
  %s671 = scalar_lea.vmem [#allocation2], 128
  %v672 = vld [vmem:[%s671] ss:$2 sm:$0xff]
  %s673 = scalar_lea.vmem [#allocation2], 144
  %v674 = vld [vmem:[%s673] ss:$2 sm:$0xff]
  %s675 = scalar_lea.vmem [#allocation2], 160
  %v676 = vld [vmem:[%s675] ss:$2 sm:$0xff]
  %s677 = scalar_lea.vmem [#allocation2], 176
  %v678 = vld [vmem:[%s677] ss:$2 sm:$0xff]
  %s679 = scalar_lea.vmem [#allocation2], 192
  %v680 = vld [vmem:[%s679] ss:$2 sm:$0xff]
  %s681 = scalar_lea.vmem [#allocation2], 208
  %v682 = vld [vmem:[%s681] ss:$2 sm:$0xff]
  %s683 = scalar_lea.vmem [#allocation2], 224
  %v684 = vld [vmem:[%s683] ss:$2 sm:$0xff]
  %s685 = scalar_lea.vmem [#allocation2], 240
  %v686 = vld [vmem:[%s685] ss:$2 sm:$0xff]
  %s687 = scalar_lea.vmem [#allocation3], 8
  %688 = vst.msk [vmem:[%s687] sm:$0xff] %vm298, %v656
  %689 = vst.msk [vmem:[%s687 + $0x8] sm:$0xff] %vm298, %v658
  %690 = vst.msk [vmem:[%s687 + $0x10] sm:$0xff] %vm298, %v660
  %691 = vst.msk [vmem:[%s687 + $0x18] sm:$0xff] %vm298, %v662
  %692 = vst.msk [vmem:[%s687 + $0x20] sm:$0xff] %vm298, %v664
  %693 = vst.msk [vmem:[%s687 + $0x28] sm:$0xff] %vm298, %v666
  %694 = vst.msk [vmem:[%s687 + $0x30] sm:$0xff] %vm298, %v668
  %695 = vst.msk [vmem:[%s687 + $0x38] sm:$0xff] %vm298, %v670
  %696 = vst.msk [vmem:[%s687 + $0x40] sm:$0xff] %vm298, %v672
  %697 = vst.msk [vmem:[%s687 + $0x48] sm:$0xff] %vm298, %v674
  %698 = vst.msk [vmem:[%s687 + $0x50] sm:$0xff] %vm298, %v676
  %699 = vst.msk [vmem:[%s687 + $0x58] sm:$0xff] %vm298, %v678
  %700 = vst.msk [vmem:[%s687 + $0x60] sm:$0xff] %vm298, %v680
  %701 = vst.msk [vmem:[%s687 + $0x68] sm:$0xff] %vm298, %v682
  %702 = vst.msk [vmem:[%s687 + $0x70] sm:$0xff] %vm298, %v684
  %703 = vst.msk [vmem:[%s687 + $0x78] sm:$0xff] %vm298, %v686
  %704 = vst.msk [vmem:[#allocation4] sm:$0xff] %vm298, 0.0
  %vm705 = vcmask 385024
  %706 = vst.msk [vmem:[#allocation4 + $0x8] sm:$0x1] %vm705, 0.0
  %707 = vst.msk [vmem:[#allocation4] sm:$0x1] %vm705, 0.0
  %708 = vst.msk [vmem:[#allocation4 + $0x10] sm:$0x1] %vm705, 0.0
  %709 = vst.msk [vmem:[#allocation4 + $0x20] sm:$0x1] %vm705, 0.0
  %710 = vst.msk [vmem:[#allocation4 + $0x30] sm:$0x1] %vm705, 0.0
  %711 = vst.msk [vmem:[#allocation4 + $0x40] sm:$0x1] %vm705, 0.0
  %712 = vst.msk [vmem:[#allocation4 + $0x50] sm:$0x1] %vm705, 0.0
  %713 = vst.msk [vmem:[#allocation4 + $0x60] sm:$0x1] %vm705, 0.0
  %714 = vst.msk [vmem:[#allocation4 + $0x70] sm:$0x1] %vm705, 0.0
  %715 = vst.msk [vmem:[#allocation4 + $0x80] sm:$0x1] %vm705, 0.0
  %716 = vst.msk [vmem:[#allocation4 + $0x90] sm:$0x1] %vm705, 0.0
  %717 = vst.msk [vmem:[#allocation4 + $0xa0] sm:$0x1] %vm705, 0.0
  %718 = vst.msk [vmem:[#allocation4 + $0xb0] sm:$0x1] %vm705, 0.0
  %719 = vst.msk [vmem:[#allocation4 + $0xc0] sm:$0x1] %vm705, 0.0
  %720 = vst.msk [vmem:[#allocation4 + $0xd0] sm:$0x1] %vm705, 0.0
  %721 = vst.msk [vmem:[#allocation4 + $0xe0] sm:$0x1] %vm705, 0.0
  %722 = vst.msk [vmem:[#allocation4 + $0xf0] sm:$0x1] %vm705, 0.0
  %723 = vst.msk [vmem:[#allocation4 + $0x100] sm:$0x1] %vm705, 0.0
  %s724 = scalar_lea.vmem [#allocation2], 1
  %v725 = vld [vmem:[%s724] ss:$2 sm:$0xff]
  %s726 = scalar_lea.vmem [#allocation2], 17
  %v727 = vld [vmem:[%s726] ss:$2 sm:$0xff]
  %s728 = scalar_lea.vmem [#allocation2], 33
  %v729 = vld [vmem:[%s728] ss:$2 sm:$0xff]
  %s730 = scalar_lea.vmem [#allocation2], 49
  %v731 = vld [vmem:[%s730] ss:$2 sm:$0xff]
  %s732 = scalar_lea.vmem [#allocation2], 65
  %v733 = vld [vmem:[%s732] ss:$2 sm:$0xff]
  %s734 = scalar_lea.vmem [#allocation2], 81
  %v735 = vld [vmem:[%s734] ss:$2 sm:$0xff]
  %s736 = scalar_lea.vmem [#allocation2], 97
  %v737 = vld [vmem:[%s736] ss:$2 sm:$0xff]
  %s738 = scalar_lea.vmem [#allocation2], 113
  %v739 = vld [vmem:[%s738] ss:$2 sm:$0xff]
  %s740 = scalar_lea.vmem [#allocation2], 129
  %v741 = vld [vmem:[%s740] ss:$2 sm:$0xff]
  %s742 = scalar_lea.vmem [#allocation2], 145
  %v743 = vld [vmem:[%s742] ss:$2 sm:$0xff]
  %s744 = scalar_lea.vmem [#allocation2], 161
  %v745 = vld [vmem:[%s744] ss:$2 sm:$0xff]
  %s746 = scalar_lea.vmem [#allocation2], 177
  %v747 = vld [vmem:[%s746] ss:$2 sm:$0xff]
  %s748 = scalar_lea.vmem [#allocation2], 193
  %v749 = vld [vmem:[%s748] ss:$2 sm:$0xff]
  %s750 = scalar_lea.vmem [#allocation2], 209
  %v751 = vld [vmem:[%s750] ss:$2 sm:$0xff]
  %s752 = scalar_lea.vmem [#allocation2], 225
  %v753 = vld [vmem:[%s752] ss:$2 sm:$0xff]
  %s754 = scalar_lea.vmem [#allocation2], 241
  %v755 = vld [vmem:[%s754] ss:$2 sm:$0xff]
  %s756 = scalar_lea.vmem [#allocation4], 16
  %757 = vst.msk [vmem:[%s756 + $0x1] sm:$0xff] %vm298, %v725
  %758 = vst.msk [vmem:[%s756 + $0x11] sm:$0xff] %vm298, %v727
  %759 = vst.msk [vmem:[%s756 + $0x21] sm:$0xff] %vm298, %v729
  %760 = vst.msk [vmem:[%s756 + $0x31] sm:$0xff] %vm298, %v731
  %761 = vst.msk [vmem:[%s756 + $0x41] sm:$0xff] %vm298, %v733
  %762 = vst.msk [vmem:[%s756 + $0x51] sm:$0xff] %vm298, %v735
  %763 = vst.msk [vmem:[%s756 + $0x61] sm:$0xff] %vm298, %v737
  %764 = vst.msk [vmem:[%s756 + $0x71] sm:$0xff] %vm298, %v739
  %765 = vst.msk [vmem:[%s756 + $0x81] sm:$0xff] %vm298, %v741
  %766 = vst.msk [vmem:[%s756 + $0x91] sm:$0xff] %vm298, %v743
  %767 = vst.msk [vmem:[%s756 + $0xa1] sm:$0xff] %vm298, %v745
  %768 = vst.msk [vmem:[%s756 + $0xb1] sm:$0xff] %vm298, %v747
  %769 = vst.msk [vmem:[%s756 + $0xc1] sm:$0xff] %vm298, %v749
  %770 = vst.msk [vmem:[%s756 + $0xd1] sm:$0xff] %vm298, %v751
  %771 = vst.msk [vmem:[%s756 + $0xe1] sm:$0xff] %vm298, %v753
  %772 = vst.msk [vmem:[%s756 + $0xf1] sm:$0xff] %vm298, %v755
  %v773 = vld [vmem:[#allocation3] sm:$0xff]
  %v774 = vld [vmem:[#allocation3 + $0x10] sm:$0xff]
  %v775 = vld [vmem:[#allocation3 + $0x20] sm:$0xff]
  %v776 = vld [vmem:[#allocation3 + $0x30] sm:$0xff]
  %v777 = vld [vmem:[#allocation3 + $0x40] sm:$0xff]
  %v778 = vld [vmem:[#allocation3 + $0x50] sm:$0xff]
  %v779 = vld [vmem:[#allocation3 + $0x60] sm:$0xff]
  %v780 = vld [vmem:[#allocation3 + $0x70] sm:$0xff]
  %v781 = vld [vmem:[#allocation4] sm:$0xff]
  %v782 = vld [vmem:[#allocation4 + $0x8] sm:$0x1]
  %v783 = vld [vmem:[#allocation4 + $0x20] sm:$0xff]
  %v784 = vld [vmem:[#allocation4 + $0x28] sm:$0x1]
  %v785 = vld [vmem:[#allocation4 + $0x40] sm:$0xff]
  %v786 = vld [vmem:[#allocation4 + $0x48] sm:$0x1]
  %v787 = vld [vmem:[#allocation4 + $0x60] sm:$0xff]
  %v788 = vld [vmem:[#allocation4 + $0x68] sm:$0x1]
  %v789 = vld [vmem:[#allocation4 + $0x80] sm:$0xff]
  %v790 = vld [vmem:[#allocation4 + $0x88] sm:$0x1]
  %v791 = vld [vmem:[#allocation4 + $0xa0] sm:$0xff]
  %v792 = vld [vmem:[#allocation4 + $0xa8] sm:$0x1]
  %v793 = vld [vmem:[#allocation4 + $0xc0] sm:$0xff]
  %v794 = vld [vmem:[#allocation4 + $0xc8] sm:$0x1]
  %v795 = vld [vmem:[#allocation4 + $0xe0] sm:$0xff]
  %v796 = vld [vmem:[#allocation4 + $0xe8] sm:$0x1]
  %v797 = vld [vmem:[%s2] sm:$0x1]
  %v798 = vlaneseq
  %v799 = vshrl.u32 %v798, 7
  %v800 = vsub.s32 0, %v799
  %v801 = vrot.slane %v797, %v800
  %v802 = vmul.f32 %v781, %v801
  %v803 = vmul.f32 %v783, %v801
  %v804 = vmul.f32 %v785, %v801
  %v805 = vmul.f32 %v787, %v801
  %v806 = vmul.f32 %v789, %v801
  %v807 = vmul.f32 %v791, %v801
  %v808 = vmul.f32 %v793, %v801
  %v809 = vmul.f32 %v795, %v801
  %v810 = vadd.f32 %v802, 0.0
  %v811 = vadd.f32 %v803, 0.0
  %v812 = vadd.f32 %v804, 0.0
  %v813 = vadd.f32 %v805, 0.0
  %v814 = vadd.f32 %v806, 0.0
  %v815 = vadd.f32 %v807, 0.0
  %v816 = vadd.f32 %v808, 0.0
  %v817 = vadd.f32 %v809, 0.0
  %v818 = vld [vmem:[%s2 + $0x1] sm:$0x1]
  %v819 = vlaneseq
  %v820 = vshrl.u32 %v819, 7
  %v821 = vsub.s32 0, %v820
  %v822 = vrot.slane %v818, %v821
  %v823 = vmul.f32 %v773, %v822
  %v824 = vmul.f32 %v774, %v822
  %v825 = vmul.f32 %v775, %v822
  %v826 = vmul.f32 %v776, %v822
  %v827 = vmul.f32 %v777, %v822
  %v828 = vmul.f32 %v778, %v822
  %v829 = vmul.f32 %v779, %v822
  %v830 = vmul.f32 %v780, %v822
  %v831 = vadd.f32 %v810, %v823
  %v832 = vadd.f32 %v811, %v824
  %v833 = vadd.f32 %v812, %v825
  %v834 = vadd.f32 %v813, %v826
  %v835 = vadd.f32 %v814, %v827
  %v836 = vadd.f32 %v815, %v828
  %v837 = vadd.f32 %v816, %v829
  %v838 = vadd.f32 %v817, %v830
  %v839 = vld [vmem:[%s2 + $0x2] sm:$0x1]
  %v840 = vlaneseq
  %v841 = vshrl.u32 %v840, 7
  %v842 = vsub.s32 0, %v841
  %v843 = vrot.slane %v839, %v842
  %v844 = vmul.f32 %v781, %v843
  %v845 = vmul.f32 %v782, %v843
  %v846 = vmul.f32 %v783, %v843
  %v847 = vmul.f32 %v784, %v843
  %v848 = vmul.f32 %v785, %v843
  %v849 = vmul.f32 %v786, %v843
  %v850 = vmul.f32 %v787, %v843
  %v851 = vmul.f32 %v788, %v843
  %v852 = vmul.f32 %v789, %v843
  %v853 = vmul.f32 %v790, %v843
  %v854 = vmul.f32 %v791, %v843
  %v855 = vmul.f32 %v792, %v843
  %v856 = vmul.f32 %v793, %v843
  %v857 = vmul.f32 %v794, %v843
  %v858 = vmul.f32 %v795, %v843
  %v859 = vmul.f32 %v796, %v843
  %vm876 = vcmask 1046528
  %v877 = vrot.slane %v844, 1
  %v878 = vrot.slane %v845, 1
  %v879 = vsel %vm876, %v877, %v878
  %v880 = vrot.slane %v846, 1
  %v881 = vrot.slane %v847, 1
  %v882 = vsel %vm876, %v880, %v881
  %v883 = vrot.slane %v848, 1
  %v884 = vrot.slane %v849, 1
  %v885 = vsel %vm876, %v883, %v884
  %v886 = vrot.slane %v850, 1
  %v887 = vrot.slane %v851, 1
  %v888 = vsel %vm876, %v886, %v887
  %v889 = vrot.slane %v852, 1
  %v890 = vrot.slane %v853, 1
  %v891 = vsel %vm876, %v889, %v890
  %v892 = vrot.slane %v854, 1
  %v893 = vrot.slane %v855, 1
  %v894 = vsel %vm876, %v892, %v893
  %v895 = vrot.slane %v856, 1
  %v896 = vrot.slane %v857, 1
  %v897 = vsel %vm876, %v895, %v896
  %v898 = vrot.slane %v858, 1
  %v899 = vrot.slane %v859, 1
  %v900 = vsel %vm876, %v898, %v899
  %v909 = vadd.f32 %v831, %v879
  %v910 = vadd.f32 %v832, %v882
  %v911 = vadd.f32 %v833, %v885
  %v912 = vadd.f32 %v834, %v888
  %v913 = vadd.f32 %v835, %v891
  %v914 = vadd.f32 %v836, %v894
  %v915 = vadd.f32 %v837, %v897
  %v916 = vadd.f32 %v838, %v900
  %v917 = vld [vmem:[%s687] sm:$0xff]
  %v918 = vld [vmem:[%s687 + $0x10] sm:$0xff]
  %v919 = vld [vmem:[%s687 + $0x20] sm:$0xff]
  %v920 = vld [vmem:[%s687 + $0x30] sm:$0xff]
  %v921 = vld [vmem:[%s687 + $0x40] sm:$0xff]
  %v922 = vld [vmem:[%s687 + $0x50] sm:$0xff]
  %v923 = vld [vmem:[%s687 + $0x60] sm:$0xff]
  %v924 = vld [vmem:[%s687 + $0x70] sm:$0xff]
  %v925 = vld [vmem:[%s756] sm:$0xff]
  %v926 = vld [vmem:[%s756 + $0x8] sm:$0x1]
  %v927 = vld [vmem:[%s756 + $0x20] sm:$0xff]
  %v928 = vld [vmem:[%s756 + $0x28] sm:$0x1]
  %v929 = vld [vmem:[%s756 + $0x40] sm:$0xff]
  %v930 = vld [vmem:[%s756 + $0x48] sm:$0x1]
  %v931 = vld [vmem:[%s756 + $0x60] sm:$0xff]
  %v932 = vld [vmem:[%s756 + $0x68] sm:$0x1]
  %v933 = vld [vmem:[%s756 + $0x80] sm:$0xff]
  %v934 = vld [vmem:[%s756 + $0x88] sm:$0x1]
  %v935 = vld [vmem:[%s756 + $0xa0] sm:$0xff]
  %v936 = vld [vmem:[%s756 + $0xa8] sm:$0x1]
  %v937 = vld [vmem:[%s756 + $0xc0] sm:$0xff]
  %v938 = vld [vmem:[%s756 + $0xc8] sm:$0x1]
  %v939 = vld [vmem:[%s756 + $0xe0] sm:$0xff]
  %v940 = vld [vmem:[%s756 + $0xe8] sm:$0x1]
  %v941 = vld [vmem:[%s2 + $0x3] sm:$0x1]
  %v942 = vlaneseq
  %v943 = vshrl.u32 %v942, 7
  %v944 = vsub.s32 0, %v943
  %v945 = vrot.slane %v941, %v944
  %v946 = vmul.f32 %v925, %v945
  %v947 = vmul.f32 %v927, %v945
  %v948 = vmul.f32 %v929, %v945
  %v949 = vmul.f32 %v931, %v945
  %v950 = vmul.f32 %v933, %v945
  %v951 = vmul.f32 %v935, %v945
  %v952 = vmul.f32 %v937, %v945
  %v953 = vmul.f32 %v939, %v945
  %v954 = vadd.f32 %v909, %v946
  %v955 = vadd.f32 %v910, %v947
  %v956 = vadd.f32 %v911, %v948
  %v957 = vadd.f32 %v912, %v949
  %v958 = vadd.f32 %v913, %v950
  %v959 = vadd.f32 %v914, %v951
  %v960 = vadd.f32 %v915, %v952
  %v961 = vadd.f32 %v916, %v953
  %v962 = vld [vmem:[%s2 + $0x4] sm:$0x1]
  %v963 = vlaneseq
  %v964 = vshrl.u32 %v963, 7
  %v965 = vsub.s32 0, %v964
  %v966 = vrot.slane %v962, %v965
  %v967 = vmul.f32 %v917, %v966
  %v968 = vmul.f32 %v918, %v966
  %v969 = vmul.f32 %v919, %v966
  %v970 = vmul.f32 %v920, %v966
  %v971 = vmul.f32 %v921, %v966
  %v972 = vmul.f32 %v922, %v966
  %v973 = vmul.f32 %v923, %v966
  %v974 = vmul.f32 %v924, %v966
  %v975 = vadd.f32 %v954, %v967
  %v976 = vadd.f32 %v955, %v968
  %v977 = vadd.f32 %v956, %v969
  %v978 = vadd.f32 %v957, %v970
  %v979 = vadd.f32 %v958, %v971
  %v980 = vadd.f32 %v959, %v972
  %v981 = vadd.f32 %v960, %v973
  %v982 = vadd.f32 %v961, %v974
  %v983 = vld [vmem:[%s2 + $0x5] sm:$0x1]
  %v984 = vlaneseq
  %v985 = vshrl.u32 %v984, 7
  %v986 = vsub.s32 0, %v985
  %v987 = vrot.slane %v983, %v986
  %v988 = vmul.f32 %v925, %v987
  %v989 = vmul.f32 %v926, %v987
  %v990 = vmul.f32 %v927, %v987
  %v991 = vmul.f32 %v928, %v987
  %v992 = vmul.f32 %v929, %v987
  %v993 = vmul.f32 %v930, %v987
  %v994 = vmul.f32 %v931, %v987
  %v995 = vmul.f32 %v932, %v987
  %v996 = vmul.f32 %v933, %v987
  %v997 = vmul.f32 %v934, %v987
  %v998 = vmul.f32 %v935, %v987
  %v999 = vmul.f32 %v936, %v987
  %v1000 = vmul.f32 %v937, %v987
  %v1001 = vmul.f32 %v938, %v987
  %v1002 = vmul.f32 %v939, %v987
  %v1003 = vmul.f32 %v940, %v987
  %v1020 = vrot.slane %v988, 1
  %v1021 = vrot.slane %v989, 1
  %v1022 = vsel %vm876, %v1020, %v1021
  %v1023 = vrot.slane %v990, 1
  %v1024 = vrot.slane %v991, 1
  %v1025 = vsel %vm876, %v1023, %v1024
  %v1026 = vrot.slane %v992, 1
  %v1027 = vrot.slane %v993, 1
  %v1028 = vsel %vm876, %v1026, %v1027
  %v1029 = vrot.slane %v994, 1
  %v1030 = vrot.slane %v995, 1
  %v1031 = vsel %vm876, %v1029, %v1030
  %v1032 = vrot.slane %v996, 1
  %v1033 = vrot.slane %v997, 1
  %v1034 = vsel %vm876, %v1032, %v1033
  %v1035 = vrot.slane %v998, 1
  %v1036 = vrot.slane %v999, 1
  %v1037 = vsel %vm876, %v1035, %v1036
  %v1038 = vrot.slane %v1000, 1
  %v1039 = vrot.slane %v1001, 1
  %v1040 = vsel %vm876, %v1038, %v1039
  %v1041 = vrot.slane %v1002, 1
  %v1042 = vrot.slane %v1003, 1
  %v1043 = vsel %vm876, %v1041, %v1042
  %v1052 = vadd.f32 %v975, %v1022
  %v1053 = vadd.f32 %v976, %v1025
  %v1054 = vadd.f32 %v977, %v1028
  %v1055 = vadd.f32 %v978, %v1031
  %v1056 = vadd.f32 %v979, %v1034
  %v1057 = vadd.f32 %v980, %v1037
  %v1058 = vadd.f32 %v981, %v1040
  %v1059 = vadd.f32 %v982, %v1043
  %s1060 = scalar_lea.vmem [#allocation3], 16
  %v1061 = vld [vmem:[%s1060] sm:$0xff]
  %v1062 = vld [vmem:[%s1060 + $0x10] sm:$0xff]
  %v1063 = vld [vmem:[%s1060 + $0x20] sm:$0xff]
  %v1064 = vld [vmem:[%s1060 + $0x30] sm:$0xff]
  %v1065 = vld [vmem:[%s1060 + $0x40] sm:$0xff]
  %v1066 = vld [vmem:[%s1060 + $0x50] sm:$0xff]
  %v1067 = vld [vmem:[%s1060 + $0x60] sm:$0xff]
  %v1068 = vld [vmem:[%s1060 + $0x70] sm:$0xff]
  %s1069 = scalar_lea.vmem [#allocation4], 32
  %v1070 = vld [vmem:[%s1069] sm:$0xff]
  %v1071 = vld [vmem:[%s1069 + $0x8] sm:$0x1]
  %v1072 = vld [vmem:[%s1069 + $0x20] sm:$0xff]
  %v1073 = vld [vmem:[%s1069 + $0x28] sm:$0x1]
  %v1074 = vld [vmem:[%s1069 + $0x40] sm:$0xff]
  %v1075 = vld [vmem:[%s1069 + $0x48] sm:$0x1]
  %v1076 = vld [vmem:[%s1069 + $0x60] sm:$0xff]
  %v1077 = vld [vmem:[%s1069 + $0x68] sm:$0x1]
  %v1078 = vld [vmem:[%s1069 + $0x80] sm:$0xff]
  %v1079 = vld [vmem:[%s1069 + $0x88] sm:$0x1]
  %v1080 = vld [vmem:[%s1069 + $0xa0] sm:$0xff]
  %v1081 = vld [vmem:[%s1069 + $0xa8] sm:$0x1]
  %v1082 = vld [vmem:[%s1069 + $0xc0] sm:$0xff]
  %v1083 = vld [vmem:[%s1069 + $0xc8] sm:$0x1]
  %v1084 = vld [vmem:[%s1069 + $0xe0] sm:$0xff]
  %v1085 = vld [vmem:[%s1069 + $0xe8] sm:$0x1]
  %v1086 = vld [vmem:[%s2 + $0x6] sm:$0x1]
  %v1087 = vlaneseq
  %v1088 = vshrl.u32 %v1087, 7
  %v1089 = vsub.s32 0, %v1088
  %v1090 = vrot.slane %v1086, %v1089
  %v1091 = vmul.f32 %v1070, %v1090
  %v1092 = vmul.f32 %v1072, %v1090
  %v1093 = vmul.f32 %v1074, %v1090
  %v1094 = vmul.f32 %v1076, %v1090
  %v1095 = vmul.f32 %v1078, %v1090
  %v1096 = vmul.f32 %v1080, %v1090
  %v1097 = vmul.f32 %v1082, %v1090
  %v1098 = vmul.f32 %v1084, %v1090
  %v1099 = vadd.f32 %v1052, %v1091
  %v1100 = vadd.f32 %v1053, %v1092
  %v1101 = vadd.f32 %v1054, %v1093
  %v1102 = vadd.f32 %v1055, %v1094
  %v1103 = vadd.f32 %v1056, %v1095
  %v1104 = vadd.f32 %v1057, %v1096
  %v1105 = vadd.f32 %v1058, %v1097
  %v1106 = vadd.f32 %v1059, %v1098
  %v1107 = vld [vmem:[%s2 + $0x7] sm:$0x1]
  %v1108 = vlaneseq
  %v1109 = vshrl.u32 %v1108, 7
  %v1110 = vsub.s32 0, %v1109
  %v1111 = vrot.slane %v1107, %v1110
  %v1112 = vmul.f32 %v1061, %v1111
  %v1113 = vmul.f32 %v1062, %v1111
  %v1114 = vmul.f32 %v1063, %v1111
  %v1115 = vmul.f32 %v1064, %v1111
  %v1116 = vmul.f32 %v1065, %v1111
  %v1117 = vmul.f32 %v1066, %v1111
  %v1118 = vmul.f32 %v1067, %v1111
  %v1119 = vmul.f32 %v1068, %v1111
  %v1120 = vadd.f32 %v1099, %v1112
  %v1121 = vadd.f32 %v1100, %v1113
  %v1122 = vadd.f32 %v1101, %v1114
  %v1123 = vadd.f32 %v1102, %v1115
  %v1124 = vadd.f32 %v1103, %v1116
  %v1125 = vadd.f32 %v1104, %v1117
  %v1126 = vadd.f32 %v1105, %v1118
  %v1127 = vadd.f32 %v1106, %v1119
  %v1128 = vld [vmem:[%s2 + $0x8] sm:$0x1]
  %v1129 = vlaneseq
  %v1130 = vshrl.u32 %v1129, 7
  %v1131 = vsub.s32 0, %v1130
  %v1132 = vrot.slane %v1128, %v1131
  %v1133 = vmul.f32 %v1070, %v1132
  %v1134 = vmul.f32 %v1071, %v1132
  %v1135 = vmul.f32 %v1072, %v1132
  %v1136 = vmul.f32 %v1073, %v1132
  %v1137 = vmul.f32 %v1074, %v1132
  %v1138 = vmul.f32 %v1075, %v1132
  %v1139 = vmul.f32 %v1076, %v1132
  %v1140 = vmul.f32 %v1077, %v1132
  %v1141 = vmul.f32 %v1078, %v1132
  %v1142 = vmul.f32 %v1079, %v1132
  %v1143 = vmul.f32 %v1080, %v1132
  %v1144 = vmul.f32 %v1081, %v1132
  %v1145 = vmul.f32 %v1082, %v1132
  %v1146 = vmul.f32 %v1083, %v1132
  %v1147 = vmul.f32 %v1084, %v1132
  %v1148 = vmul.f32 %v1085, %v1132
  %v1165 = vrot.slane %v1133, 1
  %v1166 = vrot.slane %v1134, 1
  %v1167 = vsel %vm876, %v1165, %v1166
  %v1168 = vrot.slane %v1135, 1
  %v1169 = vrot.slane %v1136, 1
  %v1170 = vsel %vm876, %v1168, %v1169
  %v1171 = vrot.slane %v1137, 1
  %v1172 = vrot.slane %v1138, 1
  %v1173 = vsel %vm876, %v1171, %v1172
  %v1174 = vrot.slane %v1139, 1
  %v1175 = vrot.slane %v1140, 1
  %v1176 = vsel %vm876, %v1174, %v1175
  %v1177 = vrot.slane %v1141, 1
  %v1178 = vrot.slane %v1142, 1
  %v1179 = vsel %vm876, %v1177, %v1178
  %v1180 = vrot.slane %v1143, 1
  %v1181 = vrot.slane %v1144, 1
  %v1182 = vsel %vm876, %v1180, %v1181
  %v1183 = vrot.slane %v1145, 1
  %v1184 = vrot.slane %v1146, 1
  %v1185 = vsel %vm876, %v1183, %v1184
  %v1186 = vrot.slane %v1147, 1
  %v1187 = vrot.slane %v1148, 1
  %v1188 = vsel %vm876, %v1186, %v1187
  %v1197 = vadd.f32 %v1120, %v1167
  %v1198 = vadd.f32 %v1121, %v1170
  %v1199 = vadd.f32 %v1122, %v1173
  %v1200 = vadd.f32 %v1123, %v1176
  %v1201 = vadd.f32 %v1124, %v1179
  %v1202 = vadd.f32 %v1125, %v1182
  %v1203 = vadd.f32 %v1126, %v1185
  %v1204 = vadd.f32 %v1127, %v1188
  %v1205 = vsel %vm298, %v1197, 0.0
  %v1206 = vsel %vm298, %v1198, 0.0
  %v1207 = vadd.f32 %v1205, %v1206
  %v1208 = vsel %vm298, %v1199, 0.0
  %v1209 = vadd.f32 %v1207, %v1208
  %v1210 = vsel %vm298, %v1200, 0.0
  %v1211 = vadd.f32 %v1209, %v1210
  %v1212 = vsel %vm298, %v1201, 0.0
  %v1213 = vadd.f32 %v1211, %v1212
  %v1214 = vsel %vm298, %v1202, 0.0
  %v1215 = vadd.f32 %v1213, %v1214
  %v1216 = vsel %vm298, %v1203, 0.0
  %v1217 = vadd.f32 %v1215, %v1216
  %v1218 = vsel %vm298, %v1204, 0.0
  %v1219 = vadd.f32 %v1217, %v1218
  %v1220 = vrot.slane %v1219, 4
  %v1221 = vadd.f32 %v1219, %v1220
  %v1222 = vrot.slane %v1221, 2
  %v1223 = vadd.f32 %v1221, %v1222
  %v1224 = vrot.slane %v1223, 1
  %v1225 = vadd.f32 %v1223, %v1224
  %v1226 = vmul.f32 %v1197, %v1197
  %v1227 = vmul.f32 %v1198, %v1198
  %v1228 = vmul.f32 %v1199, %v1199
  %v1229 = vmul.f32 %v1200, %v1200
  %v1230 = vmul.f32 %v1201, %v1201
  %v1231 = vmul.f32 %v1202, %v1202
  %v1232 = vmul.f32 %v1203, %v1203
  %v1233 = vmul.f32 %v1204, %v1204
  %v1234 = vsel %vm298, %v1226, 0.0
  %v1235 = vsel %vm298, %v1227, 0.0
  %v1236 = vadd.f32 %v1234, %v1235
  %v1237 = vsel %vm298, %v1228, 0.0
  %v1238 = vadd.f32 %v1236, %v1237
  %v1239 = vsel %vm298, %v1229, 0.0
  %v1240 = vadd.f32 %v1238, %v1239
  %v1241 = vsel %vm298, %v1230, 0.0
  %v1242 = vadd.f32 %v1240, %v1241
  %v1243 = vsel %vm298, %v1231, 0.0
  %v1244 = vadd.f32 %v1242, %v1243
  %v1245 = vsel %vm298, %v1232, 0.0
  %v1246 = vadd.f32 %v1244, %v1245
  %v1247 = vsel %vm298, %v1233, 0.0
  %v1248 = vadd.f32 %v1246, %v1247
  %v1249 = vrot.slane %v1248, 4
  %v1250 = vadd.f32 %v1248, %v1249
  %v1251 = vrot.slane %v1250, 2
  %v1252 = vadd.f32 %v1250, %v1251
  %v1253 = vrot.slane %v1252, 1
  %v1254 = vadd.f32 %v1252, %v1253
  %v1255 = vmul.f32 %v1225, 0.015625
  %v1256 = vmul.f32 %v1254, 0.015625
  %v1257 = vmul.f32 %v1255, %v1255
  %v1258 = vsub.f32 %v1256, %v1257
  %v1259 = vmax.f32 %v1258, 0.0
  %v1260 = vld [vmem:[%s2 + $0xb] sm:$0x1]
  %v1261 = vadd.f32 %v1259, 1e-05
  %v1262 = vrsqrt.pop %v1261
  %v1263 = vmul.f32 %v1260, %v1262
  %v1264 = vld [vmem:[%s2 + $0xc] sm:$0x1]
  %v1265 = vmul.f32 %v1255, %v1263
  %v1266 = vsub.f32 %v1264, %v1265
  %v1267 = vlaneseq
  %v1268 = vshrl.u32 %v1267, 7
  %v1269 = vsub.s32 0, %v1268
  %v1270 = vrot.slane %v1263, %v1269
  %v1271 = vmul.f32 %v1197, %v1270
  %v1272 = vmul.f32 %v1198, %v1270
  %v1273 = vmul.f32 %v1199, %v1270
  %v1274 = vmul.f32 %v1200, %v1270
  %v1275 = vmul.f32 %v1201, %v1270
  %v1276 = vmul.f32 %v1202, %v1270
  %v1277 = vmul.f32 %v1203, %v1270
  %v1278 = vmul.f32 %v1204, %v1270
  %v1279 = vlaneseq
  %v1280 = vshrl.u32 %v1279, 7
  %v1281 = vsub.s32 0, %v1280
  %v1282 = vrot.slane %v1266, %v1281
  %v1283 = vadd.f32 %v1271, %v1282
  %v1284 = vadd.f32 %v1272, %v1282
  %v1285 = vadd.f32 %v1273, %v1282
  %v1286 = vadd.f32 %v1274, %v1282
  %v1287 = vadd.f32 %v1275, %v1282
  %v1288 = vadd.f32 %v1276, %v1282
  %v1289 = vadd.f32 %v1277, %v1282
  %v1290 = vadd.f32 %v1278, %v1282
  %v1291 = vmax.f32 %v1283, 0.0
  %v1292 = vmax.f32 %v1284, 0.0
  %v1293 = vmax.f32 %v1285, 0.0
  %v1294 = vmax.f32 %v1286, 0.0
  %v1295 = vmax.f32 %v1287, 0.0
  %v1296 = vmax.f32 %v1288, 0.0
  %v1297 = vmax.f32 %v1289, 0.0
  %v1298 = vmax.f32 %v1290, 0.0
  %v1300 = vsel %vm298, %v36, 0
  %v1303 = vsel %vm298, %v37, 0
  %v1306 = vsel %vm298, %v38, 0
  %v1309 = vsel %vm298, %v39, 0
  %v1312 = vsel %vm298, %v40, 0
  %v1315 = vsel %vm298, %v41, 0
  %v1318 = vsel %vm298, %v1291, 0
  %v1321 = vsel %vm298, %v1292, 0
  %v1324 = vsel %vm298, %v1293, 0
  %v1327 = vsel %vm298, %v1294, 0
  %v1330 = vsel %vm298, %v1295, 0
  %v1333 = vsel %vm298, %v1296, 0
  %v1336 = vsel %vm298, %v1297, 0
  %v1339 = vsel %vm298, %v1298, 0
  %1341 = vmatprep.subr.mxu0 0.0
  %v1342 = vand.u32 %v1318, 4294901760
  %1343 = vmatpush1.xpose.msra.mxu0 %v1342
  %1344 = vmatprep.subr.mxu0 0.0
  %v1345 = vand.u32 %v1321, 4294901760
  %1346 = vmatpush1.xpose.msra.mxu0 %v1345
  %1347 = vmatprep.subr.mxu0 0.0
  %v1348 = vand.u32 %v1324, 4294901760
  %1349 = vmatpush1.xpose.msra.mxu0 %v1348
  %1350 = vmatprep.subr.mxu0 0.0
  %v1351 = vand.u32 %v1327, 4294901760
  %1352 = vmatpush1.xpose.msra.mxu0 %v1351
  %1353 = vmatprep.subr.mxu0 0.0
  %v1354 = vand.u32 %v1330, 4294901760
  %1355 = vmatpush1.xpose.msra.mxu0 %v1354
  %1356 = vmatprep.subr.mxu0 0.0
  %v1357 = vand.u32 %v1333, 4294901760
  %1358 = vmatpush1.xpose.msra.mxu0 %v1357
  %1359 = vmatprep.subr.mxu0 0.0
  %v1360 = vand.u32 %v1336, 4294901760
  %1361 = vmatpush1.xpose.msra.mxu0 %v1360
  %1362 = vmatprep.subr.mxu0 0.0
  %v1363 = vand.u32 %v1339, 4294901760
  %1364 = vmatpush1.xpose.msra.mxu0 %v1363
  %1365 = vmatprep.subr.mxu0 0.0
  %1366 = vmatpush1.xpose.msra.mxu0 0.0
  %1367 = vmatprep.subr.mxu0 0.0
  %1368 = vmatpush1.xpose.msra.mxu0 0.0
  %1369 = vmatprep.subr.mxu0 0.0
  %1370 = vmatpush1.xpose.msra.mxu0 0.0
  %1371 = vmatprep.subr.mxu0 0.0
  %1372 = vmatpush1.xpose.msra.mxu0 0.0
  %1373 = vmatprep.subr.mxu0 0.0
  %1374 = vmatpush1.xpose.msra.mxu0 0.0
  %1375 = vmatprep.subr.mxu0 0.0
  %1376 = vmatpush1.xpose.msra.mxu0 0.0
  %1377 = vmatprep.subr.mxu0 0.0
  %1378 = vmatpush1.xpose.msra.mxu0 0.0
  %1379 = vmatprep.subr.mxu0 0.0
  %1380 = vmatpush1.xpose.msra.mxu0 0.0
  %1381 = vmatprep.subr.mxu0 0.0
  %1382 = vmatpush1.xpose.msra.mxu0 0.0
  %1383 = vmatprep.subr.mxu0 0.0
  %1384 = vmatpush1.xpose.msra.mxu0 0.0
  %1385 = vmatprep.subr.mxu0 0.0
  %1386 = vmatpush1.xpose.msra.mxu0 0.0
  %1387 = vmatprep.subr.mxu0 0.0
  %1388 = vmatpush1.xpose.msra.mxu0 0.0
  %1389 = vmatprep.subr.mxu0 0.0
  %1390 = vmatpush1.xpose.msra.mxu0 0.0
  %1391 = vmatprep.subr.mxu0 0.0
  %1392 = vmatpush1.xpose.msra.mxu0 0.0
  %1393 = vmatprep.subr.mxu0 0.0
  %1394 = vmatpush1.xpose.msra.mxu0 0.0
  %1395 = vmatprep.subr.mxu0 0.0
  %1396 = vmatpush1.xpose.msra.mxu0 0.0
  %1397 = vmatprep.subr.mxu0 0.0
  %1398 = vmatpush1.xpose.msra.mxu0 0.0
  %1399 = vmatprep.subr.mxu0 0.0
  %1400 = vmatpush1.xpose.msra.mxu0 0.0
  %1401 = vmatprep.subr.mxu0 0.0
  %1402 = vmatpush1.xpose.msra.mxu0 0.0
  %1403 = vmatprep.subr.mxu0 0.0
  %1404 = vmatpush1.xpose.msra.mxu0 0.0
  %1405 = vmatprep.subr.mxu0 0.0
  %1406 = vmatpush1.xpose.msra.mxu0 0.0
  %1407 = vmatprep.subr.mxu0 0.0
  %1408 = vmatpush1.xpose.msra.mxu0 0.0
  %1409 = vmatprep.subr.mxu0 0.0
  %1410 = vmatpush1.xpose.msra.mxu0 0.0
  %1411 = vmatprep.subr.mxu0 0.0
  %1412 = vmatpush1.xpose.msra.mxu0 0.0
  %1413 = vmatprep.mubr.f32.mxu0 0.0
  %v1414 = vand.u32 %v1300, 4294901760
  %v1415 = vsub.f32 %v1300, %v1414
  %v1416 = vand.u32 %v1415, 4294901760
  %v1417 = vsub.f32 %v1415, %v1416
  %v1418 = vand.u32 %v1417, 4294901760
  %1419 = vmatmul.mubr.f32.gmra.mrb[0].mxu0 %v1418
  %v1420 = vpop.f32.mrb[0].mxu0
  %v1421 = vadd.f32 0.0, %v1420
  %v1422 = vpop.f32.mrb[0].mxu0
  %1423 = vmatprep.mubr.f32.mxu0 0.0
  %v1424 = vand.u32 %v1303, 4294901760
  %v1425 = vsub.f32 %v1303, %v1424
  %v1426 = vand.u32 %v1425, 4294901760
  %v1427 = vsub.f32 %v1425, %v1426
  %v1428 = vand.u32 %v1427, 4294901760
  %1429 = vmatmul.mubr.f32.gmra.mrb[0].mxu0 %v1428
  %v1430 = vpop.f32.mrb[0].mxu0
  %v1431 = vadd.f32 0.0, %v1430
  %v1432 = vpop.f32.mrb[0].mxu0
  %1433 = vmatprep.mubr.f32.mxu0 0.0
  %v1434 = vand.u32 %v1306, 4294901760
  %v1435 = vsub.f32 %v1306, %v1434
  %v1436 = vand.u32 %v1435, 4294901760
  %v1437 = vsub.f32 %v1435, %v1436
  %v1438 = vand.u32 %v1437, 4294901760
  %1439 = vmatmul.mubr.f32.gmra.mrb[0].mxu0 %v1438
  %v1440 = vpop.f32.mrb[0].mxu0
  %v1441 = vadd.f32 0.0, %v1440
  %v1442 = vpop.f32.mrb[0].mxu0
  %1443 = vmatprep.mubr.f32.mxu0 0.0
  %v1444 = vand.u32 %v1309, 4294901760
  %v1445 = vsub.f32 %v1309, %v1444
  %v1446 = vand.u32 %v1445, 4294901760
  %v1447 = vsub.f32 %v1445, %v1446
  %v1448 = vand.u32 %v1447, 4294901760
  %1449 = vmatmul.mubr.f32.gmra.mrb[0].mxu0 %v1448
  %v1450 = vpop.f32.mrb[0].mxu0
  %v1451 = vadd.f32 0.0, %v1450
  %v1452 = vpop.f32.mrb[0].mxu0
  %1453 = vmatprep.mubr.f32.mxu0 0.0
  %v1454 = vand.u32 %v1312, 4294901760
  %v1455 = vsub.f32 %v1312, %v1454
  %v1456 = vand.u32 %v1455, 4294901760
  %v1457 = vsub.f32 %v1455, %v1456
  %v1458 = vand.u32 %v1457, 4294901760
  %1459 = vmatmul.mubr.f32.gmra.mrb[0].mxu0 %v1458
  %v1460 = vpop.f32.mrb[0].mxu0
  %v1461 = vadd.f32 0.0, %v1460
  %v1462 = vpop.f32.mrb[0].mxu0
  %1463 = vmatprep.mubr.f32.mxu0 0.0
  %v1464 = vand.u32 %v1315, 4294901760
  %v1465 = vsub.f32 %v1315, %v1464
  %v1466 = vand.u32 %v1465, 4294901760
  %v1467 = vsub.f32 %v1465, %v1466
  %v1468 = vand.u32 %v1467, 4294901760
  %1469 = vmatmul.mubr.f32.gmra.mrb[0].mxu0 %v1468
  %v1470 = vpop.f32.mrb[0].mxu0
  %v1471 = vadd.f32 0.0, %v1470
  %v1472 = vpop.f32.mrb[0].mxu0
  %1473 = vdwg.mxu0
  %1474 = vmatprep.subr.mxu0 0.0
  %v1475 = vand.u32 %v1318, 4294901760
  %v1476 = vsub.f32 %v1318, %v1475
  %v1477 = vand.u32 %v1476, 4294901760
  %v1478 = vsub.f32 %v1476, %v1477
  %v1479 = vand.u32 %v1478, 4294901760
  %1480 = vmatpush1.xpose.msra.mxu0 %v1479
  %1481 = vmatprep.subr.mxu0 0.0
  %v1482 = vand.u32 %v1321, 4294901760
  %v1483 = vsub.f32 %v1321, %v1482
  %v1484 = vand.u32 %v1483, 4294901760
  %v1485 = vsub.f32 %v1483, %v1484
  %v1486 = vand.u32 %v1485, 4294901760
  %1487 = vmatpush1.xpose.msra.mxu0 %v1486
  %1488 = vmatprep.subr.mxu0 0.0
  %v1489 = vand.u32 %v1324, 4294901760
  %v1490 = vsub.f32 %v1324, %v1489
  %v1491 = vand.u32 %v1490, 4294901760
  %v1492 = vsub.f32 %v1490, %v1491
  %v1493 = vand.u32 %v1492, 4294901760
  %1494 = vmatpush1.xpose.msra.mxu0 %v1493
  %1495 = vmatprep.subr.mxu0 0.0
  %v1496 = vand.u32 %v1327, 4294901760
  %v1497 = vsub.f32 %v1327, %v1496
  %v1498 = vand.u32 %v1497, 4294901760
  %v1499 = vsub.f32 %v1497, %v1498
  %v1500 = vand.u32 %v1499, 4294901760
  %1501 = vmatpush1.xpose.msra.mxu0 %v1500
  %1502 = vmatprep.subr.mxu0 0.0
  %v1503 = vand.u32 %v1330, 4294901760
  %v1504 = vsub.f32 %v1330, %v1503
  %v1505 = vand.u32 %v1504, 4294901760
  %v1506 = vsub.f32 %v1504, %v1505
  %v1507 = vand.u32 %v1506, 4294901760
  %1508 = vmatpush1.xpose.msra.mxu0 %v1507
  %1509 = vmatprep.subr.mxu0 0.0
  %v1510 = vand.u32 %v1333, 4294901760
  %v1511 = vsub.f32 %v1333, %v1510
  %v1512 = vand.u32 %v1511, 4294901760
  %v1513 = vsub.f32 %v1511, %v1512
  %v1514 = vand.u32 %v1513, 4294901760
  %1515 = vmatpush1.xpose.msra.mxu0 %v1514
  %1516 = vmatprep.subr.mxu0 0.0
  %v1517 = vand.u32 %v1336, 4294901760
  %v1518 = vsub.f32 %v1336, %v1517
  %v1519 = vand.u32 %v1518, 4294901760
  %v1520 = vsub.f32 %v1518, %v1519
  %v1521 = vand.u32 %v1520, 4294901760
  %1522 = vmatpush1.xpose.msra.mxu0 %v1521
  %1523 = vmatprep.subr.mxu0 0.0
  %v1524 = vand.u32 %v1339, 4294901760
  %v1525 = vsub.f32 %v1339, %v1524
  %v1526 = vand.u32 %v1525, 4294901760
  %v1527 = vsub.f32 %v1525, %v1526
  %v1528 = vand.u32 %v1527, 4294901760
  %1529 = vmatpush1.xpose.msra.mxu0 %v1528
  %1530 = vmatprep.subr.mxu0 0.0
  %1531 = vmatpush1.xpose.msra.mxu0 0.0
  %1532 = vmatprep.subr.mxu0 0.0
  %1533 = vmatpush1.xpose.msra.mxu0 0.0
  %1534 = vmatprep.subr.mxu0 0.0
  %1535 = vmatpush1.xpose.msra.mxu0 0.0
  %1536 = vmatprep.subr.mxu0 0.0
  %1537 = vmatpush1.xpose.msra.mxu0 0.0
  %1538 = vmatprep.subr.mxu0 0.0
  %1539 = vmatpush1.xpose.msra.mxu0 0.0
  %1540 = vmatprep.subr.mxu0 0.0
  %1541 = vmatpush1.xpose.msra.mxu0 0.0
  %1542 = vmatprep.subr.mxu0 0.0
  %1543 = vmatpush1.xpose.msra.mxu0 0.0
  %1544 = vmatprep.subr.mxu0 0.0
  %1545 = vmatpush1.xpose.msra.mxu0 0.0
  %1546 = vmatprep.subr.mxu0 0.0
  %1547 = vmatpush1.xpose.msra.mxu0 0.0
  %1548 = vmatprep.subr.mxu0 0.0
  %1549 = vmatpush1.xpose.msra.mxu0 0.0
  %1550 = vmatprep.subr.mxu0 0.0
  %1551 = vmatpush1.xpose.msra.mxu0 0.0
  %1552 = vmatprep.subr.mxu0 0.0
  %1553 = vmatpush1.xpose.msra.mxu0 0.0
  %1554 = vmatprep.subr.mxu0 0.0
  %1555 = vmatpush1.xpose.msra.mxu0 0.0
  %1556 = vmatprep.subr.mxu0 0.0
  %1557 = vmatpush1.xpose.msra.mxu0 0.0
  %1558 = vmatprep.subr.mxu0 0.0
  %1559 = vmatpush1.xpose.msra.mxu0 0.0
  %1560 = vmatprep.subr.mxu0 0.0
  %1561 = vmatpush1.xpose.msra.mxu0 0.0
  %1562 = vmatprep.subr.mxu0 0.0
  %1563 = vmatpush1.xpose.msra.mxu0 0.0
  %1564 = vmatprep.subr.mxu0 0.0
  %1565 = vmatpush1.xpose.msra.mxu0 0.0
  %1566 = vmatprep.subr.mxu0 0.0
  %1567 = vmatpush1.xpose.msra.mxu0 0.0
  %1568 = vmatprep.subr.mxu0 0.0
  %1569 = vmatpush1.xpose.msra.mxu0 0.0
  %1570 = vmatprep.subr.mxu0 0.0
  %1571 = vmatpush1.xpose.msra.mxu0 0.0
  %1572 = vmatprep.subr.mxu0 0.0
  %1573 = vmatpush1.xpose.msra.mxu0 0.0
  %1574 = vmatprep.subr.mxu0 0.0
  %1575 = vmatpush1.xpose.msra.mxu0 0.0
  %1576 = vmatprep.subr.mxu0 0.0
  %1577 = vmatpush1.xpose.msra.mxu0 0.0
  %1578 = vmatprep.mubr.f32.mxu0 0.0
  %v1579 = vand.u32 %v1300, 4294901760
  %1580 = vmatmul.mubr.f32.gmra.mrb[0].mxu0 %v1579
  %v1581 = vpop.f32.mrb[0].mxu0
  %v1582 = vadd.f32 %v1421, %v1581
  %v1583 = vpop.f32.mrb[0].mxu0
  %1584 = vmatprep.mubr.f32.mxu0 0.0
  %v1585 = vand.u32 %v1303, 4294901760
  %1586 = vmatmul.mubr.f32.gmra.mrb[0].mxu0 %v1585
  %v1587 = vpop.f32.mrb[0].mxu0
  %v1588 = vadd.f32 %v1431, %v1587
  %v1589 = vpop.f32.mrb[0].mxu0
  %1590 = vmatprep.mubr.f32.mxu0 0.0
  %v1591 = vand.u32 %v1306, 4294901760
  %1592 = vmatmul.mubr.f32.gmra.mrb[0].mxu0 %v1591
  %v1593 = vpop.f32.mrb[0].mxu0
  %v1594 = vadd.f32 %v1441, %v1593
  %v1595 = vpop.f32.mrb[0].mxu0
  %1596 = vmatprep.mubr.f32.mxu0 0.0
  %v1597 = vand.u32 %v1309, 4294901760
  %1598 = vmatmul.mubr.f32.gmra.mrb[0].mxu0 %v1597
  %v1599 = vpop.f32.mrb[0].mxu0
  %v1600 = vadd.f32 %v1451, %v1599
  %v1601 = vpop.f32.mrb[0].mxu0
  %1602 = vmatprep.mubr.f32.mxu0 0.0
  %v1603 = vand.u32 %v1312, 4294901760
  %1604 = vmatmul.mubr.f32.gmra.mrb[0].mxu0 %v1603
  %v1605 = vpop.f32.mrb[0].mxu0
  %v1606 = vadd.f32 %v1461, %v1605
  %v1607 = vpop.f32.mrb[0].mxu0
  %1608 = vmatprep.mubr.f32.mxu0 0.0
  %v1609 = vand.u32 %v1315, 4294901760
  %1610 = vmatmul.mubr.f32.gmra.mrb[0].mxu0 %v1609
  %v1611 = vpop.f32.mrb[0].mxu0
  %v1612 = vadd.f32 %v1471, %v1611
  %v1613 = vpop.f32.mrb[0].mxu0
  %1614 = vdwg.mxu0
  %1615 = vmatprep.subr.mxu0 0.0
  %v1616 = vand.u32 %v1318, 4294901760
  %v1617 = vsub.f32 %v1318, %v1616
  %1618 = vmatpush1.xpose.msra.mxu0 %v1617
  %1619 = vmatprep.subr.mxu0 0.0
  %v1620 = vand.u32 %v1321, 4294901760
  %v1621 = vsub.f32 %v1321, %v1620
  %1622 = vmatpush1.xpose.msra.mxu0 %v1621
  %1623 = vmatprep.subr.mxu0 0.0
  %v1624 = vand.u32 %v1324, 4294901760
  %v1625 = vsub.f32 %v1324, %v1624
  %1626 = vmatpush1.xpose.msra.mxu0 %v1625
  %1627 = vmatprep.subr.mxu0 0.0
  %v1628 = vand.u32 %v1327, 4294901760
  %v1629 = vsub.f32 %v1327, %v1628
  %1630 = vmatpush1.xpose.msra.mxu0 %v1629
  %1631 = vmatprep.subr.mxu0 0.0
  %v1632 = vand.u32 %v1330, 4294901760
  %v1633 = vsub.f32 %v1330, %v1632
  %1634 = vmatpush1.xpose.msra.mxu0 %v1633
  %1635 = vmatprep.subr.mxu0 0.0
  %v1636 = vand.u32 %v1333, 4294901760
  %v1637 = vsub.f32 %v1333, %v1636
  %1638 = vmatpush1.xpose.msra.mxu0 %v1637
  %1639 = vmatprep.subr.mxu0 0.0
  %v1640 = vand.u32 %v1336, 4294901760
  %v1641 = vsub.f32 %v1336, %v1640
  %1642 = vmatpush1.xpose.msra.mxu0 %v1641
  %1643 = vmatprep.subr.mxu0 0.0
  %v1644 = vand.u32 %v1339, 4294901760
  %v1645 = vsub.f32 %v1339, %v1644
  %1646 = vmatpush1.xpose.msra.mxu0 %v1645
  %1647 = vmatprep.subr.mxu0 0.0
  %1648 = vmatpush1.xpose.msra.mxu0 0.0
  %1649 = vmatprep.subr.mxu0 0.0
  %1650 = vmatpush1.xpose.msra.mxu0 0.0
  %1651 = vmatprep.subr.mxu0 0.0
  %1652 = vmatpush1.xpose.msra.mxu0 0.0
  %1653 = vmatprep.subr.mxu0 0.0
  %1654 = vmatpush1.xpose.msra.mxu0 0.0
  %1655 = vmatprep.subr.mxu0 0.0
  %1656 = vmatpush1.xpose.msra.mxu0 0.0
  %1657 = vmatprep.subr.mxu0 0.0
  %1658 = vmatpush1.xpose.msra.mxu0 0.0
  %1659 = vmatprep.subr.mxu0 0.0
  %1660 = vmatpush1.xpose.msra.mxu0 0.0
  %1661 = vmatprep.subr.mxu0 0.0
  %1662 = vmatpush1.xpose.msra.mxu0 0.0
  %1663 = vmatprep.subr.mxu0 0.0
  %1664 = vmatpush1.xpose.msra.mxu0 0.0
  %1665 = vmatprep.subr.mxu0 0.0
  %1666 = vmatpush1.xpose.msra.mxu0 0.0
  %1667 = vmatprep.subr.mxu0 0.0
  %1668 = vmatpush1.xpose.msra.mxu0 0.0
  %1669 = vmatprep.subr.mxu0 0.0
  %1670 = vmatpush1.xpose.msra.mxu0 0.0
  %1671 = vmatprep.subr.mxu0 0.0
  %1672 = vmatpush1.xpose.msra.mxu0 0.0
  %1673 = vmatprep.subr.mxu0 0.0
  %1674 = vmatpush1.xpose.msra.mxu0 0.0
  %1675 = vmatprep.subr.mxu0 0.0
  %1676 = vmatpush1.xpose.msra.mxu0 0.0
  %1677 = vmatprep.subr.mxu0 0.0
  %1678 = vmatpush1.xpose.msra.mxu0 0.0
  %1679 = vmatprep.subr.mxu0 0.0
  %1680 = vmatpush1.xpose.msra.mxu0 0.0
  %1681 = vmatprep.subr.mxu0 0.0
  %1682 = vmatpush1.xpose.msra.mxu0 0.0
  %1683 = vmatprep.subr.mxu0 0.0
  %1684 = vmatpush1.xpose.msra.mxu0 0.0
  %1685 = vmatprep.subr.mxu0 0.0
  %1686 = vmatpush1.xpose.msra.mxu0 0.0
  %1687 = vmatprep.subr.mxu0 0.0
  %1688 = vmatpush1.xpose.msra.mxu0 0.0
  %1689 = vmatprep.subr.mxu0 0.0
  %1690 = vmatpush1.xpose.msra.mxu0 0.0
  %1691 = vmatprep.subr.mxu0 0.0
  %1692 = vmatpush1.xpose.msra.mxu0 0.0
  %1693 = vmatprep.subr.mxu0 0.0
  %1694 = vmatpush1.xpose.msra.mxu0 0.0
  %1695 = vmatprep.mubr.f32.mxu0 0.0
  %v1696 = vand.u32 %v1300, 4294901760
  %v1697 = vsub.f32 %v1300, %v1696
  %1698 = vmatmul.mubr.f32.gmra.mrb[0].mxu0 %v1697
  %v1699 = vpop.f32.mrb[0].mxu0
  %v1700 = vadd.f32 %v1582, %v1699
  %v1701 = vpop.f32.mrb[0].mxu0
  %1702 = vmatprep.mubr.f32.mxu0 0.0
  %v1703 = vand.u32 %v1303, 4294901760
  %v1704 = vsub.f32 %v1303, %v1703
  %1705 = vmatmul.mubr.f32.gmra.mrb[0].mxu0 %v1704
  %v1706 = vpop.f32.mrb[0].mxu0
  %v1707 = vadd.f32 %v1588, %v1706
  %v1708 = vpop.f32.mrb[0].mxu0
  %1709 = vmatprep.mubr.f32.mxu0 0.0
  %v1710 = vand.u32 %v1306, 4294901760
  %v1711 = vsub.f32 %v1306, %v1710
  %1712 = vmatmul.mubr.f32.gmra.mrb[0].mxu0 %v1711
  %v1713 = vpop.f32.mrb[0].mxu0
  %v1714 = vadd.f32 %v1594, %v1713
  %v1715 = vpop.f32.mrb[0].mxu0
  %1716 = vmatprep.mubr.f32.mxu0 0.0
  %v1717 = vand.u32 %v1309, 4294901760
  %v1718 = vsub.f32 %v1309, %v1717
  %1719 = vmatmul.mubr.f32.gmra.mrb[0].mxu0 %v1718
  %v1720 = vpop.f32.mrb[0].mxu0
  %v1721 = vadd.f32 %v1600, %v1720
  %v1722 = vpop.f32.mrb[0].mxu0
  %1723 = vmatprep.mubr.f32.mxu0 0.0
  %v1724 = vand.u32 %v1312, 4294901760
  %v1725 = vsub.f32 %v1312, %v1724
  %1726 = vmatmul.mubr.f32.gmra.mrb[0].mxu0 %v1725
  %v1727 = vpop.f32.mrb[0].mxu0
  %v1728 = vadd.f32 %v1606, %v1727
  %v1729 = vpop.f32.mrb[0].mxu0
  %1730 = vmatprep.mubr.f32.mxu0 0.0
  %v1731 = vand.u32 %v1315, 4294901760
  %v1732 = vsub.f32 %v1315, %v1731
  %1733 = vmatmul.mubr.f32.gmra.mrb[0].mxu0 %v1732
  %v1734 = vpop.f32.mrb[0].mxu0
  %v1735 = vadd.f32 %v1612, %v1734
  %v1736 = vpop.f32.mrb[0].mxu0
  %1737 = vdwg.mxu0
  %1738 = vmatprep.subr.mxu0 0.0
  %v1739 = vand.u32 %v1318, 4294901760
  %1740 = vmatpush1.xpose.msra.mxu0 %v1739
  %1741 = vmatprep.subr.mxu0 0.0
  %v1742 = vand.u32 %v1321, 4294901760
  %1743 = vmatpush1.xpose.msra.mxu0 %v1742
  %1744 = vmatprep.subr.mxu0 0.0
  %v1745 = vand.u32 %v1324, 4294901760
  %1746 = vmatpush1.xpose.msra.mxu0 %v1745
  %1747 = vmatprep.subr.mxu0 0.0
  %v1748 = vand.u32 %v1327, 4294901760
  %1749 = vmatpush1.xpose.msra.mxu0 %v1748
  %1750 = vmatprep.subr.mxu0 0.0
  %v1751 = vand.u32 %v1330, 4294901760
  %1752 = vmatpush1.xpose.msra.mxu0 %v1751
  %1753 = vmatprep.subr.mxu0 0.0
  %v1754 = vand.u32 %v1333, 4294901760
  %1755 = vmatpush1.xpose.msra.mxu0 %v1754
  %1756 = vmatprep.subr.mxu0 0.0
  %v1757 = vand.u32 %v1336, 4294901760
  %1758 = vmatpush1.xpose.msra.mxu0 %v1757
  %1759 = vmatprep.subr.mxu0 0.0
  %v1760 = vand.u32 %v1339, 4294901760
  %1761 = vmatpush1.xpose.msra.mxu0 %v1760
  %1762 = vmatprep.subr.mxu0 0.0
  %1763 = vmatpush1.xpose.msra.mxu0 0.0
  %1764 = vmatprep.subr.mxu0 0.0
  %1765 = vmatpush1.xpose.msra.mxu0 0.0
  %1766 = vmatprep.subr.mxu0 0.0
  %1767 = vmatpush1.xpose.msra.mxu0 0.0
  %1768 = vmatprep.subr.mxu0 0.0
  %1769 = vmatpush1.xpose.msra.mxu0 0.0
  %1770 = vmatprep.subr.mxu0 0.0
  %1771 = vmatpush1.xpose.msra.mxu0 0.0
  %1772 = vmatprep.subr.mxu0 0.0
  %1773 = vmatpush1.xpose.msra.mxu0 0.0
  %1774 = vmatprep.subr.mxu0 0.0
  %1775 = vmatpush1.xpose.msra.mxu0 0.0
  %1776 = vmatprep.subr.mxu0 0.0
  %1777 = vmatpush1.xpose.msra.mxu0 0.0
  %1778 = vmatprep.subr.mxu0 0.0
  %1779 = vmatpush1.xpose.msra.mxu0 0.0
  %1780 = vmatprep.subr.mxu0 0.0
  %1781 = vmatpush1.xpose.msra.mxu0 0.0
  %1782 = vmatprep.subr.mxu0 0.0
  %1783 = vmatpush1.xpose.msra.mxu0 0.0
  %1784 = vmatprep.subr.mxu0 0.0
  %1785 = vmatpush1.xpose.msra.mxu0 0.0
  %1786 = vmatprep.subr.mxu0 0.0
  %1787 = vmatpush1.xpose.msra.mxu0 0.0
  %1788 = vmatprep.subr.mxu0 0.0
  %1789 = vmatpush1.xpose.msra.mxu0 0.0
  %1790 = vmatprep.subr.mxu0 0.0
  %1791 = vmatpush1.xpose.msra.mxu0 0.0
  %1792 = vmatprep.subr.mxu0 0.0
  %1793 = vmatpush1.xpose.msra.mxu0 0.0
  %1794 = vmatprep.subr.mxu0 0.0
  %1795 = vmatpush1.xpose.msra.mxu0 0.0
  %1796 = vmatprep.subr.mxu0 0.0
  %1797 = vmatpush1.xpose.msra.mxu0 0.0
  %1798 = vmatprep.subr.mxu0 0.0
  %1799 = vmatpush1.xpose.msra.mxu0 0.0
  %1800 = vmatprep.subr.mxu0 0.0
  %1801 = vmatpush1.xpose.msra.mxu0 0.0
  %1802 = vmatprep.subr.mxu0 0.0
  %1803 = vmatpush1.xpose.msra.mxu0 0.0
  %1804 = vmatprep.subr.mxu0 0.0
  %1805 = vmatpush1.xpose.msra.mxu0 0.0
  %1806 = vmatprep.subr.mxu0 0.0
  %1807 = vmatpush1.xpose.msra.mxu0 0.0
  %1808 = vmatprep.subr.mxu0 0.0
  %1809 = vmatpush1.xpose.msra.mxu0 0.0
  %1810 = vmatprep.mubr.f32.mxu0 0.0
  %v1811 = vand.u32 %v1300, 4294901760
  %v1812 = vsub.f32 %v1300, %v1811
  %v1813 = vand.u32 %v1812, 4294901760
  %1814 = vmatmul.mubr.f32.gmra.mrb[0].mxu0 %v1813
  %v1815 = vpop.f32.mrb[0].mxu0
  %v1816 = vadd.f32 %v1700, %v1815
  %v1817 = vpop.f32.mrb[0].mxu0
  %1818 = vmatprep.mubr.f32.mxu0 0.0
  %v1819 = vand.u32 %v1303, 4294901760
  %v1820 = vsub.f32 %v1303, %v1819
  %v1821 = vand.u32 %v1820, 4294901760
  %1822 = vmatmul.mubr.f32.gmra.mrb[0].mxu0 %v1821
  %v1823 = vpop.f32.mrb[0].mxu0
  %v1824 = vadd.f32 %v1707, %v1823
  %v1825 = vpop.f32.mrb[0].mxu0
  %1826 = vmatprep.mubr.f32.mxu0 0.0
  %v1827 = vand.u32 %v1306, 4294901760
  %v1828 = vsub.f32 %v1306, %v1827
  %v1829 = vand.u32 %v1828, 4294901760
  %1830 = vmatmul.mubr.f32.gmra.mrb[0].mxu0 %v1829
  %v1831 = vpop.f32.mrb[0].mxu0
  %v1832 = vadd.f32 %v1714, %v1831
  %v1833 = vpop.f32.mrb[0].mxu0
  %1834 = vmatprep.mubr.f32.mxu0 0.0
  %v1835 = vand.u32 %v1309, 4294901760
  %v1836 = vsub.f32 %v1309, %v1835
  %v1837 = vand.u32 %v1836, 4294901760
  %1838 = vmatmul.mubr.f32.gmra.mrb[0].mxu0 %v1837
  %v1839 = vpop.f32.mrb[0].mxu0
  %v1840 = vadd.f32 %v1721, %v1839
  %v1841 = vpop.f32.mrb[0].mxu0
  %1842 = vmatprep.mubr.f32.mxu0 0.0
  %v1843 = vand.u32 %v1312, 4294901760
  %v1844 = vsub.f32 %v1312, %v1843
  %v1845 = vand.u32 %v1844, 4294901760
  %1846 = vmatmul.mubr.f32.gmra.mrb[0].mxu0 %v1845
  %v1847 = vpop.f32.mrb[0].mxu0
  %v1848 = vadd.f32 %v1728, %v1847
  %v1849 = vpop.f32.mrb[0].mxu0
  %1850 = vmatprep.mubr.f32.mxu0 0.0
  %v1851 = vand.u32 %v1315, 4294901760
  %v1852 = vsub.f32 %v1315, %v1851
  %v1853 = vand.u32 %v1852, 4294901760
  %1854 = vmatmul.mubr.f32.gmra.mrb[0].mxu0 %v1853
  %v1855 = vpop.f32.mrb[0].mxu0
  %v1856 = vadd.f32 %v1735, %v1855
  %v1857 = vpop.f32.mrb[0].mxu0
  %1858 = vdwg.mxu0
  %1859 = vmatprep.subr.mxu0 0.0
  %v1860 = vand.u32 %v1318, 4294901760
  %v1861 = vsub.f32 %v1318, %v1860
  %v1862 = vand.u32 %v1861, 4294901760
  %1863 = vmatpush1.xpose.msra.mxu0 %v1862
  %1864 = vmatprep.subr.mxu0 0.0
  %v1865 = vand.u32 %v1321, 4294901760
  %v1866 = vsub.f32 %v1321, %v1865
  %v1867 = vand.u32 %v1866, 4294901760
  %1868 = vmatpush1.xpose.msra.mxu0 %v1867
  %1869 = vmatprep.subr.mxu0 0.0
  %v1870 = vand.u32 %v1324, 4294901760
  %v1871 = vsub.f32 %v1324, %v1870
  %v1872 = vand.u32 %v1871, 4294901760
  %1873 = vmatpush1.xpose.msra.mxu0 %v1872
  %1874 = vmatprep.subr.mxu0 0.0
  %v1875 = vand.u32 %v1327, 4294901760
  %v1876 = vsub.f32 %v1327, %v1875
  %v1877 = vand.u32 %v1876, 4294901760
  %1878 = vmatpush1.xpose.msra.mxu0 %v1877
  %1879 = vmatprep.subr.mxu0 0.0
  %v1880 = vand.u32 %v1330, 4294901760
  %v1881 = vsub.f32 %v1330, %v1880
  %v1882 = vand.u32 %v1881, 4294901760
  %1883 = vmatpush1.xpose.msra.mxu0 %v1882
  %1884 = vmatprep.subr.mxu0 0.0
  %v1885 = vand.u32 %v1333, 4294901760
  %v1886 = vsub.f32 %v1333, %v1885
  %v1887 = vand.u32 %v1886, 4294901760
  %1888 = vmatpush1.xpose.msra.mxu0 %v1887
  %1889 = vmatprep.subr.mxu0 0.0
  %v1890 = vand.u32 %v1336, 4294901760
  %v1891 = vsub.f32 %v1336, %v1890
  %v1892 = vand.u32 %v1891, 4294901760
  %1893 = vmatpush1.xpose.msra.mxu0 %v1892
  %1894 = vmatprep.subr.mxu0 0.0
  %v1895 = vand.u32 %v1339, 4294901760
  %v1896 = vsub.f32 %v1339, %v1895
  %v1897 = vand.u32 %v1896, 4294901760
  %1898 = vmatpush1.xpose.msra.mxu0 %v1897
  %1899 = vmatprep.subr.mxu0 0.0
  %1900 = vmatpush1.xpose.msra.mxu0 0.0
  %1901 = vmatprep.subr.mxu0 0.0
  %1902 = vmatpush1.xpose.msra.mxu0 0.0
  %1903 = vmatprep.subr.mxu0 0.0
  %1904 = vmatpush1.xpose.msra.mxu0 0.0
  %1905 = vmatprep.subr.mxu0 0.0
  %1906 = vmatpush1.xpose.msra.mxu0 0.0
  %1907 = vmatprep.subr.mxu0 0.0
  %1908 = vmatpush1.xpose.msra.mxu0 0.0
  %1909 = vmatprep.subr.mxu0 0.0
  %1910 = vmatpush1.xpose.msra.mxu0 0.0
  %1911 = vmatprep.subr.mxu0 0.0
  %1912 = vmatpush1.xpose.msra.mxu0 0.0
  %1913 = vmatprep.subr.mxu0 0.0
  %1914 = vmatpush1.xpose.msra.mxu0 0.0
  %1915 = vmatprep.subr.mxu0 0.0
  %1916 = vmatpush1.xpose.msra.mxu0 0.0
  %1917 = vmatprep.subr.mxu0 0.0
  %1918 = vmatpush1.xpose.msra.mxu0 0.0
  %1919 = vmatprep.subr.mxu0 0.0
  %1920 = vmatpush1.xpose.msra.mxu0 0.0
  %1921 = vmatprep.subr.mxu0 0.0
  %1922 = vmatpush1.xpose.msra.mxu0 0.0
  %1923 = vmatprep.subr.mxu0 0.0
  %1924 = vmatpush1.xpose.msra.mxu0 0.0
  %1925 = vmatprep.subr.mxu0 0.0
  %1926 = vmatpush1.xpose.msra.mxu0 0.0
  %1927 = vmatprep.subr.mxu0 0.0
  %1928 = vmatpush1.xpose.msra.mxu0 0.0
  %1929 = vmatprep.subr.mxu0 0.0
  %1930 = vmatpush1.xpose.msra.mxu0 0.0
  %1931 = vmatprep.subr.mxu0 0.0
  %1932 = vmatpush1.xpose.msra.mxu0 0.0
  %1933 = vmatprep.subr.mxu0 0.0
  %1934 = vmatpush1.xpose.msra.mxu0 0.0
  %1935 = vmatprep.subr.mxu0 0.0
  %1936 = vmatpush1.xpose.msra.mxu0 0.0
  %1937 = vmatprep.subr.mxu0 0.0
  %1938 = vmatpush1.xpose.msra.mxu0 0.0
  %1939 = vmatprep.subr.mxu0 0.0
  %1940 = vmatpush1.xpose.msra.mxu0 0.0
  %1941 = vmatprep.subr.mxu0 0.0
  %1942 = vmatpush1.xpose.msra.mxu0 0.0
  %1943 = vmatprep.subr.mxu0 0.0
  %1944 = vmatpush1.xpose.msra.mxu0 0.0
  %1945 = vmatprep.subr.mxu0 0.0
  %1946 = vmatpush1.xpose.msra.mxu0 0.0
  %1947 = vmatprep.mubr.f32.mxu0 0.0
  %v1948 = vand.u32 %v1300, 4294901760
  %1949 = vmatmul.mubr.f32.gmra.mrb[0].mxu0 %v1948
  %v1950 = vpop.f32.mrb[0].mxu0
  %v1951 = vadd.f32 %v1816, %v1950
  %v1952 = vpop.f32.mrb[0].mxu0
  %1953 = vmatprep.mubr.f32.mxu0 0.0
  %v1954 = vand.u32 %v1303, 4294901760
  %1955 = vmatmul.mubr.f32.gmra.mrb[0].mxu0 %v1954
  %v1956 = vpop.f32.mrb[0].mxu0
  %v1957 = vadd.f32 %v1824, %v1956
  %v1958 = vpop.f32.mrb[0].mxu0
  %1959 = vmatprep.mubr.f32.mxu0 0.0
  %v1960 = vand.u32 %v1306, 4294901760
  %1961 = vmatmul.mubr.f32.gmra.mrb[0].mxu0 %v1960
  %v1962 = vpop.f32.mrb[0].mxu0
  %v1963 = vadd.f32 %v1832, %v1962
  %v1964 = vpop.f32.mrb[0].mxu0
  %1965 = vmatprep.mubr.f32.mxu0 0.0
  %v1966 = vand.u32 %v1309, 4294901760
  %1967 = vmatmul.mubr.f32.gmra.mrb[0].mxu0 %v1966
  %v1968 = vpop.f32.mrb[0].mxu0
  %v1969 = vadd.f32 %v1840, %v1968
  %v1970 = vpop.f32.mrb[0].mxu0
  %1971 = vmatprep.mubr.f32.mxu0 0.0
  %v1972 = vand.u32 %v1312, 4294901760
  %1973 = vmatmul.mubr.f32.gmra.mrb[0].mxu0 %v1972
  %v1974 = vpop.f32.mrb[0].mxu0
  %v1975 = vadd.f32 %v1848, %v1974
  %v1976 = vpop.f32.mrb[0].mxu0
  %1977 = vmatprep.mubr.f32.mxu0 0.0
  %v1978 = vand.u32 %v1315, 4294901760
  %1979 = vmatmul.mubr.f32.gmra.mrb[0].mxu0 %v1978
  %v1980 = vpop.f32.mrb[0].mxu0
  %v1981 = vadd.f32 %v1856, %v1980
  %v1982 = vpop.f32.mrb[0].mxu0
  %1983 = vdwg.mxu0
  %1984 = vmatprep.subr.mxu0 0.0
  %v1985 = vand.u32 %v1318, 4294901760
  %1986 = vmatpush1.xpose.msra.mxu0 %v1985
  %1987 = vmatprep.subr.mxu0 0.0
  %v1988 = vand.u32 %v1321, 4294901760
  %1989 = vmatpush1.xpose.msra.mxu0 %v1988
  %1990 = vmatprep.subr.mxu0 0.0
  %v1991 = vand.u32 %v1324, 4294901760
  %1992 = vmatpush1.xpose.msra.mxu0 %v1991
  %1993 = vmatprep.subr.mxu0 0.0
  %v1994 = vand.u32 %v1327, 4294901760
  %1995 = vmatpush1.xpose.msra.mxu0 %v1994
  %1996 = vmatprep.subr.mxu0 0.0
  %v1997 = vand.u32 %v1330, 4294901760
  %1998 = vmatpush1.xpose.msra.mxu0 %v1997
  %1999 = vmatprep.subr.mxu0 0.0
  %v2000 = vand.u32 %v1333, 4294901760
  %2001 = vmatpush1.xpose.msra.mxu0 %v2000
  %2002 = vmatprep.subr.mxu0 0.0
  %v2003 = vand.u32 %v1336, 4294901760
  %2004 = vmatpush1.xpose.msra.mxu0 %v2003
  %2005 = vmatprep.subr.mxu0 0.0
  %v2006 = vand.u32 %v1339, 4294901760
  %2007 = vmatpush1.xpose.msra.mxu0 %v2006
  %2008 = vmatprep.subr.mxu0 0.0
  %2009 = vmatpush1.xpose.msra.mxu0 0.0
  %2010 = vmatprep.subr.mxu0 0.0
  %2011 = vmatpush1.xpose.msra.mxu0 0.0
  %2012 = vmatprep.subr.mxu0 0.0
  %2013 = vmatpush1.xpose.msra.mxu0 0.0
  %2014 = vmatprep.subr.mxu0 0.0
  %2015 = vmatpush1.xpose.msra.mxu0 0.0
  %2016 = vmatprep.subr.mxu0 0.0
  %2017 = vmatpush1.xpose.msra.mxu0 0.0
  %2018 = vmatprep.subr.mxu0 0.0
  %2019 = vmatpush1.xpose.msra.mxu0 0.0
  %2020 = vmatprep.subr.mxu0 0.0
  %2021 = vmatpush1.xpose.msra.mxu0 0.0
  %2022 = vmatprep.subr.mxu0 0.0
  %2023 = vmatpush1.xpose.msra.mxu0 0.0
  %2024 = vmatprep.subr.mxu0 0.0
  %2025 = vmatpush1.xpose.msra.mxu0 0.0
  %2026 = vmatprep.subr.mxu0 0.0
  %2027 = vmatpush1.xpose.msra.mxu0 0.0
  %2028 = vmatprep.subr.mxu0 0.0
  %2029 = vmatpush1.xpose.msra.mxu0 0.0
  %2030 = vmatprep.subr.mxu0 0.0
  %2031 = vmatpush1.xpose.msra.mxu0 0.0
  %2032 = vmatprep.subr.mxu0 0.0
  %2033 = vmatpush1.xpose.msra.mxu0 0.0
  %2034 = vmatprep.subr.mxu0 0.0
  %2035 = vmatpush1.xpose.msra.mxu0 0.0
  %2036 = vmatprep.subr.mxu0 0.0
  %2037 = vmatpush1.xpose.msra.mxu0 0.0
  %2038 = vmatprep.subr.mxu0 0.0
  %2039 = vmatpush1.xpose.msra.mxu0 0.0
  %2040 = vmatprep.subr.mxu0 0.0
  %2041 = vmatpush1.xpose.msra.mxu0 0.0
  %2042 = vmatprep.subr.mxu0 0.0
  %2043 = vmatpush1.xpose.msra.mxu0 0.0
  %2044 = vmatprep.subr.mxu0 0.0
  %2045 = vmatpush1.xpose.msra.mxu0 0.0
  %2046 = vmatprep.subr.mxu0 0.0
  %2047 = vmatpush1.xpose.msra.mxu0 0.0
  %2048 = vmatprep.subr.mxu0 0.0
  %2049 = vmatpush1.xpose.msra.mxu0 0.0
  %2050 = vmatprep.subr.mxu0 0.0
  %2051 = vmatpush1.xpose.msra.mxu0 0.0
  %2052 = vmatprep.subr.mxu0 0.0
  %2053 = vmatpush1.xpose.msra.mxu0 0.0
  %2054 = vmatprep.subr.mxu0 0.0
  %2055 = vmatpush1.xpose.msra.mxu0 0.0
  %2056 = vmatprep.mubr.f32.mxu0 0.0
  %v2057 = vand.u32 %v1300, 4294901760
  %2058 = vmatmul.mubr.f32.gmra.mrb[0].mxu0 %v2057
  %v2059 = vpop.f32.mrb[0].mxu0
  %v2060 = vadd.f32 %v1951, %v2059
  %v2061 = vpop.f32.mrb[0].mxu0
  %2062 = vmatprep.mubr.f32.mxu0 0.0
  %v2063 = vand.u32 %v1303, 4294901760
  %2064 = vmatmul.mubr.f32.gmra.mrb[0].mxu0 %v2063
  %v2065 = vpop.f32.mrb[0].mxu0
  %v2066 = vadd.f32 %v1957, %v2065
  %v2067 = vpop.f32.mrb[0].mxu0
  %2068 = vmatprep.mubr.f32.mxu0 0.0
  %v2069 = vand.u32 %v1306, 4294901760
  %2070 = vmatmul.mubr.f32.gmra.mrb[0].mxu0 %v2069
  %v2071 = vpop.f32.mrb[0].mxu0
  %v2072 = vadd.f32 %v1963, %v2071
  %v2073 = vpop.f32.mrb[0].mxu0
  %2074 = vmatprep.mubr.f32.mxu0 0.0
  %v2075 = vand.u32 %v1309, 4294901760
  %2076 = vmatmul.mubr.f32.gmra.mrb[0].mxu0 %v2075
  %v2077 = vpop.f32.mrb[0].mxu0
  %v2078 = vadd.f32 %v1969, %v2077
  %v2079 = vpop.f32.mrb[0].mxu0
  %2080 = vmatprep.mubr.f32.mxu0 0.0
  %v2081 = vand.u32 %v1312, 4294901760
  %2082 = vmatmul.mubr.f32.gmra.mrb[0].mxu0 %v2081
  %v2083 = vpop.f32.mrb[0].mxu0
  %v2084 = vadd.f32 %v1975, %v2083
  %v2085 = vpop.f32.mrb[0].mxu0
  %2086 = vmatprep.mubr.f32.mxu0 0.0
  %v2087 = vand.u32 %v1315, 4294901760
  %2088 = vmatmul.mubr.f32.gmra.mrb[0].mxu0 %v2087
  %v2089 = vpop.f32.mrb[0].mxu0
  %v2090 = vadd.f32 %v1981, %v2089
  %v2091 = vpop.f32.mrb[0].mxu0
  %2092 = vdwg.mxu0
  %vm2093 = vcmask 523264
  %2094 = vst.msk [vmem:[%s3] sm:$0xff] %vm2093, %v2060
  %2095 = vst.msk [vmem:[%s3 + $0x8] sm:$0xff] %vm2093, %v2066
  %2096 = vst.msk [vmem:[%s3 + $0x10] sm:$0xff] %vm2093, %v2072
  %2097 = vst.msk [vmem:[%s3 + $0x18] sm:$0xff] %vm2093, %v2078
  %2098 = vst.msk [vmem:[%s3 + $0x20] sm:$0xff] %vm2093, %v2084
  %2099 = vst.msk [vmem:[%s3 + $0x28] sm:$0xff] %vm2093, %v2090
  // Predicated region
  $region14: #{forward_prepared.1} parent=0 // pred_check
    _
  $region15: #{forward_prepared.1} parent=0 // pred_check_branch
    %2101 = sbr.rel (0) target = $region17
  $region16: #{forward_prepared.1} parent=0 // pred_region
    _
  $region17: #{forward_prepared.1} parent=0 // pred_fallthru
    _
  // Predicated region
  $region18: #{forward_prepared.1} parent=0 // pred_check
    _
  $region19: #{forward_prepared.1} parent=0 // pred_check_branch
    %2103 = sbr.rel (0) target = $region21
  $region20: #{forward_prepared.1} parent=0 // pred_region
    _
  $region21: #{forward_prepared.1} parent=0 // pred_fallthru
    _

</llo_original>
